<compile_context>
chip_gen: v7x
topology: tpu7x:2x2x1
jax: 0.10.0
libtpu: 0.0.40
codegen_flags: <defaults>
</compile_context>

<pallas_src>
import math
from functools import partial

import numpy as np
import jax
import jax.numpy as jnp
from jax.experimental import pallas as pl
from jax.experimental.pallas import tpu as pltpu


_INV_SQRT2 = 1.0 / math.sqrt(2.0)


def _gelu_exact(x):
    # nn.GELU() default (approximate='none'): 0.5*x*(1+erf(x/sqrt(2)))
    return 0.5 * x * (1.0 + jax.lax.erf(x * _INV_SQRT2))


# ---------------------------------------------------------------------------
# Fused kernel: one grid step per Bt images, flattened (C, Bt*HW) in VMEM.
# ---------------------------------------------------------------------------
def _scse_block_kernel(x_ref, mask_ref, dww_ref, dwb_ref, lng_ref, lnb_ref,
                       w1_ref, b1_ref, w2_ref, b2_ref,
                       wc1t_ref, wc2_ref, ws_ref, bs_ref, o_ref,
                       *, H, W, Bt, use_bf16):
    HW = H * W
    N = Bt * HW

    # ---- flatten the Bt-image block to (C, Bt*HW) along the lane axis ----
    if Bt == 1:
        x = x_ref[0].astype(jnp.float32)                               # (C, HW)
    else:
        x = jnp.concatenate([x_ref[b].astype(jnp.float32) for b in range(Bt)],
                            axis=1)                                    # (C, N)

    # ---- depthwise 3x3 conv (stride 1, pad 1, groups=C) via lane rolls ----
    # Boundary masks are host-precomputed constants; a roll never leaks data
    # across image boundaries because any leaking tap is masked to zero.
    k_all = dww_ref[...].astype(jnp.float32)                           # (C, 9)
    masks_all = mask_ref[...].astype(jnp.float32)                      # (8, N)
    acc = x * k_all[:, 4:5]                                            # center tap
    j = 0
    for k in range(9):
        if k == 4:
            continue
        dh, dw = k // 3 - 1, k % 3 - 1
        off = dh * W + dw
        shifted = pltpu.roll(x, (-off) % N, axis=1)                    # XLU slot
        m = masks_all[j:j + 1, :]                                      # (1, N)
        acc = acc + (shifted * m) * k_all[:, k:k + 1]
        j += 1
    y = acc + dwb_ref[...].astype(jnp.float32)                         # (C, N)

    # ---- WithBias LayerNorm over the channel (sublane) axis ----
    g = lng_ref[...].astype(jnp.float32)                               # (C, 1)
    beta = lnb_ref[...].astype(jnp.float32)                            # (C, 1)
    mu = jnp.mean(y, axis=0, keepdims=True)                            # (1, N)
    yc = y - mu
    var = jnp.mean(yc * yc, axis=0, keepdims=True)                     # unbiased=False
    xn = yc * jax.lax.rsqrt(var + 1e-5) * g + beta                     # (C, N)

    # ---- 1x1 conv C->4C, GELU, 1x1 conv 4C->C  (MXU matmuls, N = Bt*HW) ----
    mm_dtype = jnp.bfloat16 if use_bf16 else jnp.float32
    h1 = jnp.dot(w1_ref[...].astype(mm_dtype), xn.astype(mm_dtype),
                 preferred_element_type=jnp.float32) + b1_ref[...].astype(jnp.float32)
    h1 = _gelu_exact(h1)                                               # (4C, N)
    # NOTE: for very large H*W, chunk h1 over the 4C axis (GELU per chunk,
    # accumulate into res) to cut peak VMEM — matters first on v7x (64 MiB).
    res = jnp.dot(w2_ref[...].astype(mm_dtype), h1.astype(mm_dtype),
                  preferred_element_type=jnp.float32) + b2_ref[...].astype(jnp.float32)

    # ---- sSE: 1x1 conv C->1 + sigmoid (VPU multiply + sublane reduce) ----
    sse = jax.nn.sigmoid(
        jnp.sum(res * ws_ref[...].astype(jnp.float32), axis=0, keepdims=True)
        + bs_ref[...].astype(jnp.float32))                             # (1, N)

    # ---- cSE (per image, off-MXU) + epilogue: out = res*(cse+sse) + x ----
    wc1t = wc1t_ref[...].astype(jnp.float32)                           # (C, Cr)
    wc2 = wc2_ref[...].astype(jnp.float32)                             # (C, Cr)
    inv_hw = 1.0 / HW
    for b in range(Bt):
        lo, hi = b * HW, (b + 1) * HW                                  # static slices
        res_b = res[:, lo:hi]
        ypool = jnp.sum(res_b, axis=1, keepdims=True) * inv_hw         # (C, 1)
        hc = jnp.maximum(jnp.sum(wc1t * ypool, axis=0, keepdims=True), 0.0)   # (1, Cr)
        cse_b = jax.nn.sigmoid(jnp.sum(wc2 * hc, axis=1, keepdims=True))      # (C, 1)
        out_b = res_b * (cse_b + sse[:, lo:hi]) + x[:, lo:hi]
        o_ref[b] = out_b.astype(o_ref.dtype)


# ---------------------------------------------------------------------------
# Block-size selection / VMEM budgeting
# ---------------------------------------------------------------------------
def _vmem_bytes_estimate(bt, C, C4, HW, itemsize):
    n = bt * HW
    io = 2 * 2 * bt * C * HW * itemsize            # double-buffered x and out blocks
    temps = (6 * C + 2 * C4) * n * 4               # x, y, xn, res, out (+ h1 headroom)
    masks = 2 * 8 * n * 4
    weights = 2 * (2 * C4 * C + 32 * C + 64) * 4
    return io + temps + masks + weights


def _choose_bt(B, C, C4, HW, itemsize):
    """Images per grid step: widen matmul N and amortize per-step overhead,
    while keeping the working set inside a ~40 MiB budget (safe on v7x's
    64 MiB VMEM) and leaving >= 2 grid steps when B >= 2 so
    dimension_semantics=('parallel',) can split work across v7x's two TCs."""
    budget = 40 * 1024 * 1024
    target_lanes = 8 * 1024
    best = 1
    for bt in range(1, B + 1):
        if B % bt:
            continue
        if bt * HW > max(target_lanes, HW):
            continue
        if _vmem_bytes_estimate(bt, C, C4, HW, itemsize) > budget:
            continue
        best = bt
    if B >= 2 and B // best < 2:
        for bt in range(best - 1, 0, -1):
            if B % bt == 0 and B // bt >= 2:
                best = bt
                break
    return best


# ---------------------------------------------------------------------------
# Wrapper
# ---------------------------------------------------------------------------
def scse_block_forward(x_nchw, p, *, use_bf16_matmul=False):
    B, C, H, W = x_nchw.shape
    HW = H * W
    C4 = p["w1"].shape[0]
    Cr = p["wc1"].shape[0]
    itemsize = jnp.dtype(x_nchw.dtype).itemsize

    Bt = _choose_bt(B, C, C4, HW, itemsize)
    N = Bt * HW
    nsteps = B // Bt

    # Free reshape (same memory layout): NCHW -> (B, C, H*W). HW here is a
    # multiple of 128 (lane-dense stores); for odd feature-map sizes one would
    # pad the spatial (lane) axis in the wrapper, never the channel axis.
    x = x_nchw.reshape(B, C, HW)

    # Host-precomputed boundary masks for the 8 non-center taps, tiled per image.
    s = np.arange(HW)
    hh, ww = s // W, s % W
    rows = []
    for k in range(9):
        if k == 4:
            continue
        dh, dw = k // 3 - 1, k % 3 - 1
        ok = (hh + dh >= 0) & (hh + dh < H) & (ww + dw >= 0) & (ww + dw < W)
        rows.append(ok.astype(np.float32))
    masks = jnp.asarray(np.tile(np.stack(rows), (1, Bt)))               # (8, N)

    wc1_t = jnp.transpose(p["wc1"])                                     # (C, Cr)

    est = _vmem_bytes_estimate(Bt, C, C4, HW, itemsize)
    vmem_limit = int(min(64 * 2**20, max(32 * 2**20, 2 * est)))

    kernel = partial(_scse_block_kernel, H=H, W=W, Bt=Bt, use_bf16=use_bf16_matmul)

    out = pl.pallas_call(
        kernel,
        out_shape=jax.ShapeDtypeStruct((B, C, HW), x_nchw.dtype),
        grid=(nsteps,),
        in_specs=[
            pl.BlockSpec((Bt, C, HW), lambda i: (i, 0, 0)),   # x (Bt images / step)
            pl.BlockSpec((8, N), lambda i: (0, 0)),           # depthwise boundary masks
            pl.BlockSpec((C, 9), lambda i: (0, 0)),           # depthwise weights
            pl.BlockSpec((C, 1), lambda i: (0, 0)),           # depthwise bias
            pl.BlockSpec((C, 1), lambda i: (0, 0)),           # LN gamma
            pl.BlockSpec((C, 1), lambda i: (0, 0)),           # LN beta
            pl.BlockSpec((C4, C), lambda i: (0, 0)),          # w1 (C -> 4C)
            pl.BlockSpec((C4, 1), lambda i: (0, 0)),          # b1
            pl.BlockSpec((C, C4), lambda i: (0, 0)),          # w2 (4C -> C)
            pl.BlockSpec((C, 1), lambda i: (0, 0)),           # b2
            pl.BlockSpec((C, Cr), lambda i: (0, 0)),          # cSE linear 1 (transposed)
            pl.BlockSpec((C, Cr), lambda i: (0, 0)),          # cSE linear 2
            pl.BlockSpec((C, 1), lambda i: (0, 0)),           # sSE conv weight
            pl.BlockSpec((1, 1), lambda i: (0, 0)),           # sSE conv bias
        ],
        out_specs=pl.BlockSpec((Bt, C, HW), lambda i: (i, 0, 0)),
        compiler_params=pltpu.CompilerParams(
            dimension_semantics=("parallel",),
            vmem_limit_bytes=vmem_limit),
    )(x, masks, p["dw_w"], p["dw_b"], p["ln_g"], p["ln_b"],
      p["w1"], p["b1"], p["w2"], p["b2"],
      wc1_t, p["wc2"], p["ws"], p["bs"])

    return out.reshape(B, C, H, W)


# ---------------------------------------------------------------------------
# Pure-JAX reference (mirrors the PyTorch module) for a correctness check.
# ---------------------------------------------------------------------------
def _reference_forward(x_nchw, p):
    B, C, H, W = x_nchw.shape
    hi = jax.lax.Precision.HIGHEST
    x = x_nchw.astype(jnp.float32)
    # depthwise 3x3 conv, pad 1, bias
    k = p["dw_w"].reshape(C, 3, 3)
    xp = jnp.pad(x, ((0, 0), (0, 0), (1, 1), (1, 1)))
    y = jnp.zeros_like(x)
    for kh in range(3):
        for kw in range(3):
            y = y + xp[:, :, kh:kh + H, kw:kw + W] * k[None, :, kh, kw, None, None]
    y = y + p["dw_b"].reshape(1, C, 1, 1)
    # WithBias LayerNorm over channel
    t = y.transpose(0, 2, 3, 1)
    mu = t.mean(-1, keepdims=True)
    var = ((t - mu) ** 2).mean(-1, keepdims=True)
    t = (t - mu) / jnp.sqrt(var + 1e-5) * p["ln_g"].reshape(C) + p["ln_b"].reshape(C)
    # 1x1 conv -> GELU -> 1x1 conv
    h1 = jnp.einsum('bhwc,dc->bhwd', t, p["w1"], precision=hi) + p["b1"].reshape(-1)
    h1 = 0.5 * h1 * (1.0 + jax.lax.erf(h1 / math.sqrt(2.0)))
    res = jnp.einsum('bhwd,cd->bhwc', h1, p["w2"], precision=hi) + p["b2"].reshape(-1)
    res = res.transpose(0, 3, 1, 2)                          # (B,C,H,W)
    # scSE
    ypool = res.mean(axis=(2, 3))                            # (B,C)
    hc = jnp.maximum(jnp.einsum('bc,rc->br', ypool, p["wc1"], precision=hi), 0.0)
    cse = jax.nn.sigmoid(jnp.einsum('br,cr->bc', hc, p["wc2"], precision=hi))[:, :, None, None]
    sse = jax.nn.sigmoid(jnp.einsum('bchw,c->bhw', res, p["ws"].reshape(C), precision=hi)
                         + p["bs"].reshape(()))[:, None, :, :]
    return res * cse + res * sse + x


def init_params(key, n_feat, reduction):
    C, C4, Cr = n_feat, 4 * n_feat, n_feat // reduction
    ks = jax.random.split(key, 10)
    scale = 0.1
    return {
        # depthwise 3x3 conv: torch (C,1,3,3) -> (C, 9); bias (C,1)
        "dw_w": scale * jax.random.normal(ks[0], (C, 9), jnp.float32),
        "dw_b": scale * jax.random.normal(ks[1], (C, 1), jnp.float32),
        # WithBias LayerNorm (torch init: weight=1, bias=0)
        "ln_g": jnp.ones((C, 1), jnp.float32),
        "ln_b": jnp.zeros((C, 1), jnp.float32),
        # 1x1 conv C->4C: torch weight (4C,C,1,1) -> (4C,C); bias (4C,1)
        "w1": scale * jax.random.normal(ks[2], (C4, C), jnp.float32),
        "b1": scale * jax.random.normal(ks[3], (C4, 1), jnp.float32),
        # 1x1 conv 4C->C
        "w2": scale * jax.random.normal(ks[4], (C, C4), jnp.float32),
        "b2": scale * jax.random.normal(ks[5], (C, 1), jnp.float32),
        # cSE linears (bias=False): torch Linear weights (Cr,C) and (C,Cr)
        "wc1": scale * jax.random.normal(ks[6], (Cr, C), jnp.float32),
        "wc2": scale * jax.random.normal(ks[7], (C, Cr), jnp.float32),
        # sSE 1x1 conv C->1 (with bias): torch weight (1,C,1,1) -> (C,1)
        "ws": scale * jax.random.normal(ks[8], (C, 1), jnp.float32),
        "bs": scale * jax.random.normal(ks[9], (1, 1), jnp.float32),
    }


if __name__ == "__main__":
    key = jax.random.PRNGKey(0)
    B, C, H, W = 4, 16, 16, 16       # scSEBlock(n_feat=16, reduction=4)
    reduction = 4

    k_param, k_x = jax.random.split(key)
    params = init_params(k_param, C, reduction)
    x = jax.random.normal(k_x, (B, C, H, W), jnp.float32)

    out = jax.jit(scse_block_forward)(x, params)
    out = jax.block_until_ready(out)
    assert out.shape == (B, C, H, W) and out.dtype == jnp.float32
    assert bool(jnp.all(jnp.isfinite(out)))

    ref = jax.jit(_reference_forward)(x, params)
    ref = jax.block_until_ready(ref)
    err = float(jnp.max(jnp.abs(out - ref)))
    assert err < 5e-3, f"max abs error vs reference: {err}"

    print("KERNEL_OK")
</pallas_src>

<mosaic_0001>
module attributes {stable_mosaic.version = 11 : i64} {
  func.func @_scse_block_kernel(%arg0: i32, %arg1: memref<2x16x256xf32, #tpu.memory_space<vmem>>, %arg2: memref<8x512xf32, #tpu.memory_space<vmem>>, %arg3: memref<16x9xf32, #tpu.memory_space<vmem>>, %arg4: memref<16x1xf32, #tpu.memory_space<vmem>>, %arg5: memref<16x1xf32, #tpu.memory_space<vmem>>, %arg6: memref<16x1xf32, #tpu.memory_space<vmem>>, %arg7: memref<64x16xf32, #tpu.memory_space<vmem>>, %arg8: memref<64x1xf32, #tpu.memory_space<vmem>>, %arg9: memref<16x64xf32, #tpu.memory_space<vmem>>, %arg10: memref<16x1xf32, #tpu.memory_space<vmem>>, %arg11: memref<16x4xf32, #tpu.memory_space<vmem>>, %arg12: memref<16x4xf32, #tpu.memory_space<vmem>>, %arg13: memref<16x1xf32, #tpu.memory_space<vmem>>, %arg14: memref<1x1xf32, #tpu.memory_space<vmem>>, %arg15: memref<2x16x256xf32, #tpu.memory_space<vmem>>) attributes {dimension_semantics = [#tpu.dimension_semantics<parallel>], iteration_bounds = array<i64: 2>, scalar_prefetch = 0 : i64, scratch_operands = 0 : i64, tpu.core_type = #tpu.core_type<tc>, window_params = [{transform_indices = @transform_0, window_bounds = array<i64: 2, 16, 256>}, {pipeline_mode = #tpu.pipeline_mode<synchronous>, transform_indices = @transform_1, window_bounds = array<i64: 8, 512>}, {pipeline_mode = #tpu.pipeline_mode<synchronous>, transform_indices = @transform_2, window_bounds = array<i64: 16, 9>}, {pipeline_mode = #tpu.pipeline_mode<synchronous>, transform_indices = @transform_3, window_bounds = array<i64: 16, 1>}, {pipeline_mode = #tpu.pipeline_mode<synchronous>, transform_indices = @transform_4, window_bounds = array<i64: 16, 1>}, {pipeline_mode = #tpu.pipeline_mode<synchronous>, transform_indices = @transform_5, window_bounds = array<i64: 16, 1>}, {pipeline_mode = #tpu.pipeline_mode<synchronous>, transform_indices = @transform_6, window_bounds = array<i64: 64, 16>}, {pipeline_mode = #tpu.pipeline_mode<synchronous>, transform_indices = @transform_7, window_bounds = array<i64: 64, 1>}, {pipeline_mode = #tpu.pipeline_mode<synchronous>, transform_indices = @transform_8, window_bounds = array<i64: 16, 64>}, {pipeline_mode = #tpu.pipeline_mode<synchronous>, transform_indices = @transform_9, window_bounds = array<i64: 16, 1>}, {pipeline_mode = #tpu.pipeline_mode<synchronous>, transform_indices = @transform_10, window_bounds = array<i64: 16, 4>}, {pipeline_mode = #tpu.pipeline_mode<synchronous>, transform_indices = @transform_11, window_bounds = array<i64: 16, 4>}, {pipeline_mode = #tpu.pipeline_mode<synchronous>, transform_indices = @transform_12, window_bounds = array<i64: 16, 1>}, {pipeline_mode = #tpu.pipeline_mode<synchronous>, transform_indices = @transform_13, window_bounds = array<i64: 1, 1>}, {transform_indices = @transform_14, window_bounds = array<i64: 2, 16, 256>}]} {
    %c0 = arith.constant 0 : index
    %c0_0 = arith.constant 0 : index
    %c0_1 = arith.constant 0 : index
    %0 = vector.load %arg1[%c0, %c0_0, %c0_1] : memref<2x16x256xf32, #tpu.memory_space<vmem>>, vector<1x16x256xf32>
    %1 = vector.shape_cast %0 : vector<1x16x256xf32> to vector<16x256xf32>
    %c1 = arith.constant 1 : index
    %c0_2 = arith.constant 0 : index
    %c0_3 = arith.constant 0 : index
    %2 = vector.load %arg1[%c1, %c0_2, %c0_3] : memref<2x16x256xf32, #tpu.memory_space<vmem>>, vector<1x16x256xf32>
    %3 = vector.shape_cast %2 : vector<1x16x256xf32> to vector<16x256xf32>
    %4 = tpu.concatenate %1, %3 in 1 : vector<16x256xf32>, vector<16x256xf32> -> vector<16x512xf32>
    %c0_4 = arith.constant 0 : index
    %c0_5 = arith.constant 0 : index
    %5 = vector.load %arg3[%c0_4, %c0_5] : memref<16x9xf32, #tpu.memory_space<vmem>>, vector<16x9xf32>
    %c0_6 = arith.constant 0 : index
    %c0_7 = arith.constant 0 : index
    %6 = vector.load %arg2[%c0_6, %c0_7] : memref<8x512xf32, #tpu.memory_space<vmem>>, vector<8x512xf32>
    %7 = vector.extract_strided_slice %5 {offsets = [0, 4], sizes = [16, 1], strides = [1, 1]} : vector<16x9xf32> to vector<16x1xf32>
    %8 = vector.broadcast %7 : vector<16x1xf32> to vector<16x512xf32>
    %9 = arith.mulf %4, %8 : vector<16x512xf32>
    %c17_i32 = arith.constant 17 : i32
    %10 = tpu.dynamic_rotate %4 by %c17_i32 dim 1 : vector<16x512xf32>, i32 -> vector<16x512xf32>
    %11 = vector.extract_strided_slice %6 {offsets = [0, 0], sizes = [1, 512], strides = [1, 1]} : vector<8x512xf32> to vector<1x512xf32>
    %12 = vector.broadcast %11 : vector<1x512xf32> to vector<16x512xf32>
    %13 = arith.mulf %10, %12 : vector<16x512xf32>
    %14 = vector.extract_strided_slice %5 {offsets = [0, 0], sizes = [16, 1], strides = [1, 1]} : vector<16x9xf32> to vector<16x1xf32>
    %15 = vector.broadcast %14 : vector<16x1xf32> to vector<16x512xf32>
    %16 = arith.mulf %13, %15 : vector<16x512xf32>
    %17 = arith.addf %9, %16 : vector<16x512xf32>
    %c16_i32 = arith.constant 16 : i32
    %18 = tpu.dynamic_rotate %4 by %c16_i32 dim 1 : vector<16x512xf32>, i32 -> vector<16x512xf32>
    %19 = vector.extract_strided_slice %6 {offsets = [1, 0], sizes = [1, 512], strides = [1, 1]} : vector<8x512xf32> to vector<1x512xf32>
    %20 = vector.broadcast %19 : vector<1x512xf32> to vector<16x512xf32>
    %21 = arith.mulf %18, %20 : vector<16x512xf32>
    %22 = vector.extract_strided_slice %5 {offsets = [0, 1], sizes = [16, 1], strides = [1, 1]} : vector<16x9xf32> to vector<16x1xf32>
    %23 = vector.broadcast %22 : vector<16x1xf32> to vector<16x512xf32>
    %24 = arith.mulf %21, %23 : vector<16x512xf32>
    %25 = arith.addf %17, %24 : vector<16x512xf32>
    %c15_i32 = arith.constant 15 : i32
    %26 = tpu.dynamic_rotate %4 by %c15_i32 dim 1 : vector<16x512xf32>, i32 -> vector<16x512xf32>
    %27 = vector.extract_strided_slice %6 {offsets = [2, 0], sizes = [1, 512], strides = [1, 1]} : vector<8x512xf32> to vector<1x512xf32>
    %28 = vector.broadcast %27 : vector<1x512xf32> to vector<16x512xf32>
    %29 = arith.mulf %26, %28 : vector<16x512xf32>
    %30 = vector.extract_strided_slice %5 {offsets = [0, 2], sizes = [16, 1], strides = [1, 1]} : vector<16x9xf32> to vector<16x1xf32>
    %31 = vector.broadcast %30 : vector<16x1xf32> to vector<16x512xf32>
    %32 = arith.mulf %29, %31 : vector<16x512xf32>
    %33 = arith.addf %25, %32 : vector<16x512xf32>
    %c1_i32 = arith.constant 1 : i32
    %34 = tpu.dynamic_rotate %4 by %c1_i32 dim 1 : vector<16x512xf32>, i32 -> vector<16x512xf32>
    %35 = vector.extract_strided_slice %6 {offsets = [3, 0], sizes = [1, 512], strides = [1, 1]} : vector<8x512xf32> to vector<1x512xf32>
    %36 = vector.broadcast %35 : vector<1x512xf32> to vector<16x512xf32>
    %37 = arith.mulf %34, %36 : vector<16x512xf32>
    %38 = vector.extract_strided_slice %5 {offsets = [0, 3], sizes = [16, 1], strides = [1, 1]} : vector<16x9xf32> to vector<16x1xf32>
    %39 = vector.broadcast %38 : vector<16x1xf32> to vector<16x512xf32>
    %40 = arith.mulf %37, %39 : vector<16x512xf32>
    %41 = arith.addf %33, %40 : vector<16x512xf32>
    %c511_i32 = arith.constant 511 : i32
    %42 = tpu.dynamic_rotate %4 by %c511_i32 dim 1 : vector<16x512xf32>, i32 -> vector<16x512xf32>
    %43 = vector.extract_strided_slice %6 {offsets = [4, 0], sizes = [1, 512], strides = [1, 1]} : vector<8x512xf32> to vector<1x512xf32>
    %44 = vector.broadcast %43 : vector<1x512xf32> to vector<16x512xf32>
    %45 = arith.mulf %42, %44 : vector<16x512xf32>
    %46 = vector.extract_strided_slice %5 {offsets = [0, 5], sizes = [16, 1], strides = [1, 1]} : vector<16x9xf32> to vector<16x1xf32>
    %47 = vector.broadcast %46 : vector<16x1xf32> to vector<16x512xf32>
    %48 = arith.mulf %45, %47 : vector<16x512xf32>
    %49 = arith.addf %41, %48 : vector<16x512xf32>
    %c497_i32 = arith.constant 497 : i32
    %50 = tpu.dynamic_rotate %4 by %c497_i32 dim 1 : vector<16x512xf32>, i32 -> vector<16x512xf32>
    %51 = vector.extract_strided_slice %6 {offsets = [5, 0], sizes = [1, 512], strides = [1, 1]} : vector<8x512xf32> to vector<1x512xf32>
    %52 = vector.broadcast %51 : vector<1x512xf32> to vector<16x512xf32>
    %53 = arith.mulf %50, %52 : vector<16x512xf32>
    %54 = vector.extract_strided_slice %5 {offsets = [0, 6], sizes = [16, 1], strides = [1, 1]} : vector<16x9xf32> to vector<16x1xf32>
    %55 = vector.broadcast %54 : vector<16x1xf32> to vector<16x512xf32>
    %56 = arith.mulf %53, %55 : vector<16x512xf32>
    %57 = arith.addf %49, %56 : vector<16x512xf32>
    %c496_i32 = arith.constant 496 : i32
    %58 = tpu.dynamic_rotate %4 by %c496_i32 dim 1 : vector<16x512xf32>, i32 -> vector<16x512xf32>
    %59 = vector.extract_strided_slice %6 {offsets = [6, 0], sizes = [1, 512], strides = [1, 1]} : vector<8x512xf32> to vector<1x512xf32>
    %60 = vector.broadcast %59 : vector<1x512xf32> to vector<16x512xf32>
    %61 = arith.mulf %58, %60 : vector<16x512xf32>
    %62 = vector.extract_strided_slice %5 {offsets = [0, 7], sizes = [16, 1], strides = [1, 1]} : vector<16x9xf32> to vector<16x1xf32>
    %63 = vector.broadcast %62 : vector<16x1xf32> to vector<16x512xf32>
    %64 = arith.mulf %61, %63 : vector<16x512xf32>
    %65 = arith.addf %57, %64 : vector<16x512xf32>
    %c495_i32 = arith.constant 495 : i32
    %66 = tpu.dynamic_rotate %4 by %c495_i32 dim 1 : vector<16x512xf32>, i32 -> vector<16x512xf32>
    %67 = vector.extract_strided_slice %6 {offsets = [7, 0], sizes = [1, 512], strides = [1, 1]} : vector<8x512xf32> to vector<1x512xf32>
    %68 = vector.broadcast %67 : vector<1x512xf32> to vector<16x512xf32>
    %69 = arith.mulf %66, %68 : vector<16x512xf32>
    %70 = vector.extract_strided_slice %5 {offsets = [0, 8], sizes = [16, 1], strides = [1, 1]} : vector<16x9xf32> to vector<16x1xf32>
    %71 = vector.broadcast %70 : vector<16x1xf32> to vector<16x512xf32>
    %72 = arith.mulf %69, %71 : vector<16x512xf32>
    %73 = arith.addf %65, %72 : vector<16x512xf32>
    %c0_8 = arith.constant 0 : index
    %c0_9 = arith.constant 0 : index
    %74 = vector.load %arg4[%c0_8, %c0_9] : memref<16x1xf32, #tpu.memory_space<vmem>>, vector<16x1xf32>
    %75 = vector.broadcast %74 : vector<16x1xf32> to vector<16x512xf32>
    %76 = arith.addf %73, %75 : vector<16x512xf32>
    %c0_10 = arith.constant 0 : index
    %c0_11 = arith.constant 0 : index
    %77 = vector.load %arg5[%c0_10, %c0_11] : memref<16x1xf32, #tpu.memory_space<vmem>>, vector<16x1xf32>
    %c0_12 = arith.constant 0 : index
    %c0_13 = arith.constant 0 : index
    %78 = vector.load %arg6[%c0_12, %c0_13] : memref<16x1xf32, #tpu.memory_space<vmem>>, vector<16x1xf32>
    %cst = arith.constant dense<0.000000e+00> : vector<512xf32>
    %79 = vector.multi_reduction <add>, %76, %cst [0] : vector<16x512xf32> to vector<512xf32>
    %80 = vector.shape_cast %79 : vector<512xf32> to vector<1x512xf32>
    %cst_14 = arith.constant 1.600000e+01 : f32
    %81 = vector.broadcast %cst_14 : f32 to vector<1x512xf32>
    %82 = arith.divf %80, %81 : vector<1x512xf32>
    %83 = vector.broadcast %82 : vector<1x512xf32> to vector<16x512xf32>
    %84 = arith.subf %76, %83 : vector<16x512xf32>
    %85 = arith.mulf %84, %84 : vector<16x512xf32>
    %cst_15 = arith.constant dense<0.000000e+00> : vector<512xf32>
    %86 = vector.multi_reduction <add>, %85, %cst_15 [0] : vector<16x512xf32> to vector<512xf32>
    %87 = vector.shape_cast %86 : vector<512xf32> to vector<1x512xf32>
    %cst_16 = arith.constant 1.600000e+01 : f32
    %88 = vector.broadcast %cst_16 : f32 to vector<1x512xf32>
    %89 = arith.divf %87, %88 : vector<1x512xf32>
    %cst_17 = arith.constant 9.99999974E-6 : f32
    %90 = vector.broadcast %cst_17 : f32 to vector<1x512xf32>
    %91 = arith.addf %89, %90 : vector<1x512xf32>
    %92 = math.rsqrt %91 : vector<1x512xf32>
    %93 = vector.broadcast %92 : vector<1x512xf32> to vector<16x512xf32>
    %94 = arith.mulf %84, %93 : vector<16x512xf32>
    %95 = vector.broadcast %77 : vector<16x1xf32> to vector<16x512xf32>
    %96 = arith.mulf %94, %95 : vector<16x512xf32>
    %97 = vector.broadcast %78 : vector<16x1xf32> to vector<16x512xf32>
    %98 = arith.addf %96, %97 : vector<16x512xf32>
    %c0_18 = arith.constant 0 : index
    %c0_19 = arith.constant 0 : index
    %99 = vector.load %arg7[%c0_18, %c0_19] : memref<64x16xf32, #tpu.memory_space<vmem>>, vector<64x16xf32>
    %cst_20 = arith.constant dense<0.000000e+00> : vector<64x512xf32>
    %100 = tpu.matmul %99, %98, %cst_20 {dimension_numbers = #tpu.dot_dimension_numbers<[1], [0], [0], [1], [0, 0, 1, 1], [], []>} : vector<64x16xf32>, vector<16x512xf32>, vector<64x512xf32> -> vector<64x512xf32>
    %c0_21 = arith.constant 0 : index
    %c0_22 = arith.constant 0 : index
    %101 = vector.load %arg8[%c0_21, %c0_22] : memref<64x1xf32, #tpu.memory_space<vmem>>, vector<64x1xf32>
    %102 = vector.broadcast %101 : vector<64x1xf32> to vector<64x512xf32>
    %103 = arith.addf %100, %102 : vector<64x512xf32>
    %cst_23 = arith.constant 5.000000e-01 : f32
    %104 = vector.broadcast %cst_23 : f32 to vector<64x512xf32>
    %105 = arith.mulf %104, %103 : vector<64x512xf32>
    %cst_24 = arith.constant 0.707106769 : f32
    %106 = vector.broadcast %cst_24 : f32 to vector<64x512xf32>
    %107 = arith.mulf %103, %106 : vector<64x512xf32>
    %108 = math.erf %107 : vector<64x512xf32>
    %cst_25 = arith.constant 1.000000e+00 : f32
    %109 = vector.broadcast %cst_25 : f32 to vector<64x512xf32>
    %110 = arith.addf %109, %108 : vector<64x512xf32>
    %111 = arith.mulf %105, %110 : vector<64x512xf32>
    %c0_26 = arith.constant 0 : index
    %c0_27 = arith.constant 0 : index
    %112 = vector.load %arg9[%c0_26, %c0_27] : memref<16x64xf32, #tpu.memory_space<vmem>>, vector<16x64xf32>
    %cst_28 = arith.constant dense<0.000000e+00> : vector<16x512xf32>
    %113 = tpu.matmul %112, %111, %cst_28 {dimension_numbers = #tpu.dot_dimension_numbers<[1], [0], [0], [1], [0, 0, 1, 1], [], []>} : vector<16x64xf32>, vector<64x512xf32>, vector<16x512xf32> -> vector<16x512xf32>
    %c0_29 = arith.constant 0 : index
    %c0_30 = arith.constant 0 : index
    %114 = vector.load %arg10[%c0_29, %c0_30] : memref<16x1xf32, #tpu.memory_space<vmem>>, vector<16x1xf32>
    %115 = vector.broadcast %114 : vector<16x1xf32> to vector<16x512xf32>
    %116 = arith.addf %113, %115 : vector<16x512xf32>
    %c0_31 = arith.constant 0 : index
    %c0_32 = arith.constant 0 : index
    %117 = vector.load %arg13[%c0_31, %c0_32] : memref<16x1xf32, #tpu.memory_space<vmem>>, vector<16x1xf32>
    %118 = vector.broadcast %117 : vector<16x1xf32> to vector<16x512xf32>
    %119 = arith.mulf %116, %118 : vector<16x512xf32>
    %cst_33 = arith.constant dense<0.000000e+00> : vector<512xf32>
    %120 = vector.multi_reduction <add>, %119, %cst_33 [0] : vector<16x512xf32> to vector<512xf32>
    %121 = vector.shape_cast %120 : vector<512xf32> to vector<1x512xf32>
    %c0_34 = arith.constant 0 : index
    %c0_35 = arith.constant 0 : index
    %122 = vector.load %arg14[%c0_34, %c0_35] : memref<1x1xf32, #tpu.memory_space<vmem>>, vector<1x1xf32>
    %123 = vector.broadcast %122 : vector<1x1xf32> to vector<1x512xf32>
    %124 = arith.addf %121, %123 : vector<1x512xf32>
    %125 = arith.negf %124 : vector<1x512xf32>
    %126 = math.exp %125 : vector<1x512xf32>
    %cst_36 = arith.constant 1.000000e+00 : f32
    %127 = vector.broadcast %cst_36 : f32 to vector<1x512xf32>
    %128 = arith.addf %127, %126 : vector<1x512xf32>
    %129 = arith.divf %127, %128 : vector<1x512xf32>
    %c0_37 = arith.constant 0 : index
    %c0_38 = arith.constant 0 : index
    %130 = vector.load %arg11[%c0_37, %c0_38] : memref<16x4xf32, #tpu.memory_space<vmem>>, vector<16x4xf32>
    %c0_39 = arith.constant 0 : index
    %c0_40 = arith.constant 0 : index
    %131 = vector.load %arg12[%c0_39, %c0_40] : memref<16x4xf32, #tpu.memory_space<vmem>>, vector<16x4xf32>
    %132 = vector.extract_strided_slice %116 {offsets = [0, 0], sizes = [16, 256], strides = [1, 1]} : vector<16x512xf32> to vector<16x256xf32>
    %cst_41 = arith.constant dense<0.000000e+00> : vector<16xf32>
    %133 = vector.multi_reduction <add>, %132, %cst_41 [1] : vector<16x256xf32> to vector<16xf32>
    %134 = vector.shape_cast %133 : vector<16xf32> to vector<16x1xf32>
    %cst_42 = arith.constant 3.906250e-03 : f32
    %135 = vector.broadcast %cst_42 : f32 to vector<16x1xf32>
    %136 = arith.mulf %134, %135 : vector<16x1xf32>
    %137 = vector.broadcast %136 : vector<16x1xf32> to vector<16x4xf32>
    %138 = arith.mulf %130, %137 : vector<16x4xf32>
    %cst_43 = arith.constant dense<0.000000e+00> : vector<4xf32>
    %139 = vector.multi_reduction <add>, %138, %cst_43 [0] : vector<16x4xf32> to vector<4xf32>
    %140 = vector.shape_cast %139 : vector<4xf32> to vector<1x4xf32>
    %cst_44 = arith.constant 0.000000e+00 : f32
    %141 = vector.broadcast %cst_44 : f32 to vector<1x4xf32>
    %142 = arith.maximumf %140, %141 : vector<1x4xf32>
    %143 = vector.broadcast %142 : vector<1x4xf32> to vector<16x4xf32>
    %144 = arith.mulf %131, %143 : vector<16x4xf32>
    %cst_45 = arith.constant dense<0.000000e+00> : vector<16xf32>
    %145 = vector.multi_reduction <add>, %144, %cst_45 [1] : vector<16x4xf32> to vector<16xf32>
    %146 = vector.shape_cast %145 : vector<16xf32> to vector<16x1xf32>
    %147 = arith.negf %146 : vector<16x1xf32>
    %148 = math.exp %147 : vector<16x1xf32>
    %cst_46 = arith.constant 1.000000e+00 : f32
    %149 = vector.broadcast %cst_46 : f32 to vector<16x1xf32>
    %150 = arith.addf %149, %148 : vector<16x1xf32>
    %151 = arith.divf %149, %150 : vector<16x1xf32>
    %152 = vector.extract_strided_slice %129 {offsets = [0, 0], sizes = [1, 256], strides = [1, 1]} : vector<1x512xf32> to vector<1x256xf32>
    %153 = vector.broadcast %151 : vector<16x1xf32> to vector<16x256xf32>
    %154 = vector.broadcast %152 : vector<1x256xf32> to vector<16x256xf32>
    %155 = arith.addf %153, %154 : vector<16x256xf32>
    %156 = arith.mulf %132, %155 : vector<16x256xf32>
    %157 = vector.extract_strided_slice %4 {offsets = [0, 0], sizes = [16, 256], strides = [1, 1]} : vector<16x512xf32> to vector<16x256xf32>
    %158 = arith.addf %156, %157 : vector<16x256xf32>
    %c0_47 = arith.constant 0 : index
    %c0_48 = arith.constant 0 : index
    %c0_49 = arith.constant 0 : index
    %159 = vector.load %arg15[%c0_47, %c0_48, %c0_49] : memref<2x16x256xf32, #tpu.memory_space<vmem>>, vector<1x16x256xf32>
    %160 = vector.shape_cast %159 : vector<1x16x256xf32> to vector<16x256xf32>
    %161 = vector.shape_cast %158 : vector<16x256xf32> to vector<1x16x256xf32>
    tpu.vector_store %arg15[%c0_47, %c0_48, %c0_49], %161 {strides = array<i32>} : memref<2x16x256xf32, #tpu.memory_space<vmem>>, vector<1x16x256xf32>,
    %162 = vector.extract_strided_slice %116 {offsets = [0, 256], sizes = [16, 256], strides = [1, 1]} : vector<16x512xf32> to vector<16x256xf32>
    %cst_50 = arith.constant dense<0.000000e+00> : vector<16xf32>
    %163 = vector.multi_reduction <add>, %162, %cst_50 [1] : vector<16x256xf32> to vector<16xf32>
    %164 = vector.shape_cast %163 : vector<16xf32> to vector<16x1xf32>
    %cst_51 = arith.constant 3.906250e-03 : f32
    %165 = vector.broadcast %cst_51 : f32 to vector<16x1xf32>
    %166 = arith.mulf %164, %165 : vector<16x1xf32>
    %167 = vector.broadcast %166 : vector<16x1xf32> to vector<16x4xf32>
    %168 = arith.mulf %130, %167 : vector<16x4xf32>
    %cst_52 = arith.constant dense<0.000000e+00> : vector<4xf32>
    %169 = vector.multi_reduction <add>, %168, %cst_52 [0] : vector<16x4xf32> to vector<4xf32>
    %170 = vector.shape_cast %169 : vector<4xf32> to vector<1x4xf32>
    %cst_53 = arith.constant 0.000000e+00 : f32
    %171 = vector.broadcast %cst_53 : f32 to vector<1x4xf32>
    %172 = arith.maximumf %170, %171 : vector<1x4xf32>
    %173 = vector.broadcast %172 : vector<1x4xf32> to vector<16x4xf32>
    %174 = arith.mulf %131, %173 : vector<16x4xf32>
    %cst_54 = arith.constant dense<0.000000e+00> : vector<16xf32>
    %175 = vector.multi_reduction <add>, %174, %cst_54 [1] : vector<16x4xf32> to vector<16xf32>
    %176 = vector.shape_cast %175 : vector<16xf32> to vector<16x1xf32>
    %177 = arith.negf %176 : vector<16x1xf32>
    %178 = math.exp %177 : vector<16x1xf32>
    %cst_55 = arith.constant 1.000000e+00 : f32
    %179 = vector.broadcast %cst_55 : f32 to vector<16x1xf32>
    %180 = arith.addf %179, %178 : vector<16x1xf32>
    %181 = arith.divf %179, %180 : vector<16x1xf32>
    %182 = vector.extract_strided_slice %129 {offsets = [0, 256], sizes = [1, 256], strides = [1, 1]} : vector<1x512xf32> to vector<1x256xf32>
    %183 = vector.broadcast %181 : vector<16x1xf32> to vector<16x256xf32>
    %184 = vector.broadcast %182 : vector<1x256xf32> to vector<16x256xf32>
    %185 = arith.addf %183, %184 : vector<16x256xf32>
    %186 = arith.mulf %162, %185 : vector<16x256xf32>
    %187 = vector.extract_strided_slice %4 {offsets = [0, 256], sizes = [16, 256], strides = [1, 1]} : vector<16x512xf32> to vector<16x256xf32>
    %188 = arith.addf %186, %187 : vector<16x256xf32>
    %c1_56 = arith.constant 1 : index
    %c0_57 = arith.constant 0 : index
    %c0_58 = arith.constant 0 : index
    %189 = vector.load %arg15[%c1_56, %c0_57, %c0_58] : memref<2x16x256xf32, #tpu.memory_space<vmem>>, vector<1x16x256xf32>
    %190 = vector.shape_cast %189 : vector<1x16x256xf32> to vector<16x256xf32>
    %191 = vector.shape_cast %188 : vector<16x256xf32> to vector<1x16x256xf32>
    tpu.vector_store %arg15[%c1_56, %c0_57, %c0_58], %191 {strides = array<i32>} : memref<2x16x256xf32, #tpu.memory_space<vmem>>, vector<1x16x256xf32>,
    return
  }
  func.func @transform_0(%arg0: i32) -> (i32, i32, i32) {
    %c0_i32 = arith.constant 0 : i32
    %c0_i32_0 = arith.constant 0 : i32
    %c0_i32_1 = arith.constant 0 : i32
    return %arg0, %c0_i32, %c0_i32_0 : i32, i32, i32
  }
  func.func @transform_1(%arg0: i32) -> (i32, i32) {
    %c0_i32 = arith.constant 0 : i32
    %c0_i32_0 = arith.constant 0 : i32
    %c0_i32_1 = arith.constant 0 : i32
    return %c0_i32, %c0_i32_0 : i32, i32
  }
  func.func @transform_2(%arg0: i32) -> (i32, i32) {
    %c0_i32 = arith.constant 0 : i32
    %c0_i32_0 = arith.constant 0 : i32
    %c0_i32_1 = arith.constant 0 : i32
    return %c0_i32, %c0_i32_0 : i32, i32
  }
  func.func @transform_3(%arg0: i32) -> (i32, i32) {
    %c0_i32 = arith.constant 0 : i32
    %c0_i32_0 = arith.constant 0 : i32
    %c0_i32_1 = arith.constant 0 : i32
    return %c0_i32, %c0_i32_0 : i32, i32
  }
  func.func @transform_4(%arg0: i32) -> (i32, i32) {
    %c0_i32 = arith.constant 0 : i32
    %c0_i32_0 = arith.constant 0 : i32
    %c0_i32_1 = arith.constant 0 : i32
    return %c0_i32, %c0_i32_0 : i32, i32
  }
  func.func @transform_5(%arg0: i32) -> (i32, i32) {
    %c0_i32 = arith.constant 0 : i32
    %c0_i32_0 = arith.constant 0 : i32
    %c0_i32_1 = arith.constant 0 : i32
    return %c0_i32, %c0_i32_0 : i32, i32
  }
  func.func @transform_6(%arg0: i32) -> (i32, i32) {
    %c0_i32 = arith.constant 0 : i32
    %c0_i32_0 = arith.constant 0 : i32
    %c0_i32_1 = arith.constant 0 : i32
    return %c0_i32, %c0_i32_0 : i32, i32
  }
  func.func @transform_7(%arg0: i32) -> (i32, i32) {
    %c0_i32 = arith.constant 0 : i32
    %c0_i32_0 = arith.constant 0 : i32
    %c0_i32_1 = arith.constant 0 : i32
    return %c0_i32, %c0_i32_0 : i32, i32
  }
  func.func @transform_8(%arg0: i32) -> (i32, i32) {
    %c0_i32 = arith.constant 0 : i32
    %c0_i32_0 = arith.constant 0 : i32
    %c0_i32_1 = arith.constant 0 : i32
    return %c0_i32, %c0_i32_0 : i32, i32
  }
  func.func @transform_9(%arg0: i32) -> (i32, i32) {
    %c0_i32 = arith.constant 0 : i32
    %c0_i32_0 = arith.constant 0 : i32
    %c0_i32_1 = arith.constant 0 : i32
    return %c0_i32, %c0_i32_0 : i32, i32
  }
  func.func @transform_10(%arg0: i32) -> (i32, i32) {
    %c0_i32 = arith.constant 0 : i32
    %c0_i32_0 = arith.constant 0 : i32
    %c0_i32_1 = arith.constant 0 : i32
    return %c0_i32, %c0_i32_0 : i32, i32
  }
  func.func @transform_11(%arg0: i32) -> (i32, i32) {
    %c0_i32 = arith.constant 0 : i32
    %c0_i32_0 = arith.constant 0 : i32
    %c0_i32_1 = arith.constant 0 : i32
    return %c0_i32, %c0_i32_0 : i32, i32
  }
  func.func @transform_12(%arg0: i32) -> (i32, i32) {
    %c0_i32 = arith.constant 0 : i32
    %c0_i32_0 = arith.constant 0 : i32
    %c0_i32_1 = arith.constant 0 : i32
    return %c0_i32, %c0_i32_0 : i32, i32
  }
  func.func @transform_13(%arg0: i32) -> (i32, i32) {
    %c0_i32 = arith.constant 0 : i32
    %c0_i32_0 = arith.constant 0 : i32
    %c0_i32_1 = arith.constant 0 : i32
    return %c0_i32, %c0_i32_0 : i32, i32
  }
  func.func @transform_14(%arg0: i32) -> (i32, i32, i32) {
    %c0_i32 = arith.constant 0 : i32
    %c0_i32_0 = arith.constant 0 : i32
    %c0_i32_1 = arith.constant 0 : i32
    return %arg0, %c0_i32, %c0_i32_0 : i32, i32, i32
  }
}

</mosaic_0001>

<llo_original>
// kernel: scse_block_forward.1
$region0: #{scse_block_forward.1}
  #allocation0 [shape = 'u32[]', space=smem, size = 0x4, offset = 0x4, fixed_abs, tag = 'smem constant byte address 0x4 - core index']
  #allocation1 [shape = 'u32[144,128]{1,0:T(1,128)}', space=vmem, size = 0x12000, scoped, tag = 'internal scratch']
  #allocation2 [shape = 'f32[1,1]{1,0:T(1,128)S(1)}', space=vmem, size = 0x200, scoped, tag = 'scoped memory for scse_block_forward.1']
  %s0 = inlined_call_operand.vmem [shape: f32[4,16,256], index: 0, kind: input, shape index: {}]
  %s1 = inlined_call_operand.vmem [shape: f32[8,512], index: 1, kind: input, shape index: {}]
  %s2 = inlined_call_operand.vmem [shape: f32[16,9], index: 2, kind: input, shape index: {}]
  %s3 = inlined_call_operand.vmem [shape: f32[16,1], index: 3, kind: input, shape index: {}]
  %s4 = inlined_call_operand.vmem [shape: f32[16,1], index: 4, kind: input, shape index: {}]
  %s5 = inlined_call_operand.vmem [shape: f32[16,1], index: 5, kind: input, shape index: {}]
  %s6 = inlined_call_operand.vmem [shape: f32[64,16], index: 6, kind: input, shape index: {}]
  %s7 = inlined_call_operand.vmem [shape: f32[64,1], index: 7, kind: input, shape index: {}]
  %s8 = inlined_call_operand.vmem [shape: f32[16,64], index: 8, kind: input, shape index: {}]
  %s9 = inlined_call_operand.vmem [shape: f32[16,1], index: 9, kind: input, shape index: {}]
  %s10 = inlined_call_operand.vmem [shape: f32[16,4], index: 10, kind: input, shape index: {}]
  %s11 = inlined_call_operand.vmem [shape: f32[16,4], index: 11, kind: input, shape index: {}]
  %s12 = inlined_call_operand.vmem [shape: f32[16,1], index: 12, kind: input, shape index: {}]
  %s13 = inlined_call_operand.<no memory space> [shape: f32[1,1], index: 13, kind: input, shape index: {}]
  %s14 = inlined_call_operand.vmem [shape: f32[4,16,256], index: 14, kind: output, shape index: {}]
  %s15 = sld [smem:[#allocation0]]
  $region89: #{scse_block_forward.1} parent=0
    _
  %s17 = ssub.s32 1, %s15
  %s18 = scalar_select 0, %s17, %s15
  %v19 = vstv %s13
  %20 = vst [vmem:[#allocation2] sm:$0x1] %v19
  loop: start=0, step=1, limit=4
  $region2: #{scse_block_forward.1} parent=0 // loop_pre_header
    _
  $region3: #{scse_block_forward.1} parent=0 // loop_header
    %s22 = sphi 0, %s26
    %p23 = scmp.ge.s32.totalorder %s22, 4
    %s32 = sphi 0, %s34
    %s35 = sphi 0, %s32
    %s36 = sphi 0, %s35
    %s52 = sphi 0, %s36
    %s56 = sphi 0, %s56
    %s58 = sphi 0, %s56
    %s59 = sphi 0, %s58
    %s73 = sphi 0, %s59
    %s77 = sphi 0, %s77
    %s79 = sphi 0, %s77
    %s80 = sphi 0, %s79
    %s94 = sphi 0, %s80
    %s98 = sphi 0, %s98
    %s100 = sphi 0, %s98
    %s101 = sphi 0, %s100
    %s115 = sphi 0, %s101
    %s119 = sphi 0, %s119
    %s121 = sphi 0, %s119
    %s122 = sphi 0, %s121
    %s136 = sphi 0, %s122
    %s140 = sphi 0, %s140
    %s142 = sphi 0, %s140
    %s143 = sphi 0, %s142
    %s157 = sphi 0, %s143
    %s161 = sphi 0, %s161
    %s163 = sphi 0, %s161
    %s164 = sphi 0, %s163
    %s178 = sphi 0, %s164
    %s182 = sphi 0, %s182
    %s184 = sphi 0, %s182
    %s185 = sphi 0, %s184
    %s199 = sphi 0, %s185
    %s203 = sphi 0, %s203
    %s205 = sphi 0, %s203
    %s206 = sphi 0, %s205
    %s220 = sphi 0, %s206
    %s224 = sphi 0, %s224
    %s226 = sphi 0, %s224
    %s227 = sphi 0, %s226
    %s241 = sphi 0, %s227
    %s245 = sphi 0, %s245
    %s247 = sphi 0, %s245
    %s248 = sphi 0, %s247
    %s262 = sphi 0, %s248
    %s266 = sphi 0, %s266
    %s268 = sphi 0, %s266
    %s269 = sphi 0, %s268
    %s283 = sphi 0, %s269
    %s287 = sphi 0, %s287
    %s289 = sphi 0, %s287
    %s290 = sphi 0, %s289
    %s304 = sphi 0, %s290
    %s308 = sphi 0, %s308
    %s310 = sphi 0, %s308
    %s311 = sphi 0, %s310
    %s325 = sphi 0, %s311
    %s331 = sphi 0, %s333
    %s334 = sphi 0, %s331
    %s335 = sphi 0, %s334
    %s351 = sphi 0, %s335
  $region4: #{scse_block_forward.1} parent=0 // loop_header_branch
    %25 = sbr.rel (%p23) target = $region8
  $region5: #{scse_block_forward.1} parent=0 // loop_body
    %s27 = ssub.s32 %s22, 1
    %s28 = ssub.s32 %s22, 2
    %s29 = sadd.s32 %s22, 1
    %s30 = ssub.s32 %s22, %s29
    %p31 = scmp.eq.s32.totalorder %s30, 0
    %s33 = sadd.s32 %s32, 1
    %s34 = scalar_select %p31, %s32, %s33
    %p37 = pneg %p31
    %p38 = scmp.eq.s32.totalorder %s22, 1
    %p39 = por %p37, %p38
    %p40 = scmp.ne.s32.totalorder %s32, %s35
    %p41 = scmp.eq.s32.totalorder %s22, 0
    %p42 = por %p40, %p41
    %p43 = scmp.ne.s32.totalorder %s32, %s35
    %p44 = scmp.eq.s32.totalorder %s27, 1
    %p45 = por %p43, %p44
    %p46 = scmp.ne.s32.totalorder %s35, %s36
    %p47 = scmp.eq.s32.totalorder %s27, 0
    %p48 = por %p46, %p47
    %p49 = scmp.ne.s32.totalorder %s35, %s36
    %p50 = scmp.eq.s32.totalorder %s28, 1
    %p51 = por %p49, %p50
    %p53 = scmp.ne.s32.totalorder %s36, %s52
    %p54 = scmp.eq.s32.totalorder %s28, 0
    %p55 = por %p53, %p54
    %s57 = sadd.s32 %s56, 1
    %p60 = scmp.eq.s32.totalorder %s22, 1
    %p61 = scmp.ne.s32.totalorder %s56, %s58
    %p62 = scmp.eq.s32.totalorder %s22, 0
    %p63 = por %p61, %p62
    %p64 = scmp.ne.s32.totalorder %s56, %s58
    %p65 = scmp.eq.s32.totalorder %s27, 1
    %p66 = por %p64, %p65
    %p67 = scmp.ne.s32.totalorder %s58, %s59
    %p68 = scmp.eq.s32.totalorder %s27, 0
    %p69 = por %p67, %p68
    %p70 = scmp.ne.s32.totalorder %s58, %s59
    %p71 = scmp.eq.s32.totalorder %s28, 1
    %p72 = por %p70, %p71
    %p74 = scmp.ne.s32.totalorder %s59, %s73
    %p75 = scmp.eq.s32.totalorder %s28, 0
    %p76 = por %p74, %p75
    %s78 = sadd.s32 %s77, 1
    %p81 = scmp.eq.s32.totalorder %s22, 1
    %p82 = scmp.ne.s32.totalorder %s77, %s79
    %p83 = scmp.eq.s32.totalorder %s22, 0
    %p84 = por %p82, %p83
    %p85 = scmp.ne.s32.totalorder %s77, %s79
    %p86 = scmp.eq.s32.totalorder %s27, 1
    %p87 = por %p85, %p86
    %p88 = scmp.ne.s32.totalorder %s79, %s80
    %p89 = scmp.eq.s32.totalorder %s27, 0
    %p90 = por %p88, %p89
    %p91 = scmp.ne.s32.totalorder %s79, %s80
    %p92 = scmp.eq.s32.totalorder %s28, 1
    %p93 = por %p91, %p92
    %p95 = scmp.ne.s32.totalorder %s80, %s94
    %p96 = scmp.eq.s32.totalorder %s28, 0
    %p97 = por %p95, %p96
    %s99 = sadd.s32 %s98, 1
    %p102 = scmp.eq.s32.totalorder %s22, 1
    %p103 = scmp.ne.s32.totalorder %s98, %s100
    %p104 = scmp.eq.s32.totalorder %s22, 0
    %p105 = por %p103, %p104
    %p106 = scmp.ne.s32.totalorder %s98, %s100
    %p107 = scmp.eq.s32.totalorder %s27, 1
    %p108 = por %p106, %p107
    %p109 = scmp.ne.s32.totalorder %s100, %s101
    %p110 = scmp.eq.s32.totalorder %s27, 0
    %p111 = por %p109, %p110
    %p112 = scmp.ne.s32.totalorder %s100, %s101
    %p113 = scmp.eq.s32.totalorder %s28, 1
    %p114 = por %p112, %p113
    %p116 = scmp.ne.s32.totalorder %s101, %s115
    %p117 = scmp.eq.s32.totalorder %s28, 0
    %p118 = por %p116, %p117
    %s120 = sadd.s32 %s119, 1
    %p123 = scmp.eq.s32.totalorder %s22, 1
    %p124 = scmp.ne.s32.totalorder %s119, %s121
    %p125 = scmp.eq.s32.totalorder %s22, 0
    %p126 = por %p124, %p125
    %p127 = scmp.ne.s32.totalorder %s119, %s121
    %p128 = scmp.eq.s32.totalorder %s27, 1
    %p129 = por %p127, %p128
    %p130 = scmp.ne.s32.totalorder %s121, %s122
    %p131 = scmp.eq.s32.totalorder %s27, 0
    %p132 = por %p130, %p131
    %p133 = scmp.ne.s32.totalorder %s121, %s122
    %p134 = scmp.eq.s32.totalorder %s28, 1
    %p135 = por %p133, %p134
    %p137 = scmp.ne.s32.totalorder %s122, %s136
    %p138 = scmp.eq.s32.totalorder %s28, 0
    %p139 = por %p137, %p138
    %s141 = sadd.s32 %s140, 1
    %p144 = scmp.eq.s32.totalorder %s22, 1
    %p145 = scmp.ne.s32.totalorder %s140, %s142
    %p146 = scmp.eq.s32.totalorder %s22, 0
    %p147 = por %p145, %p146
    %p148 = scmp.ne.s32.totalorder %s140, %s142
    %p149 = scmp.eq.s32.totalorder %s27, 1
    %p150 = por %p148, %p149
    %p151 = scmp.ne.s32.totalorder %s142, %s143
    %p152 = scmp.eq.s32.totalorder %s27, 0
    %p153 = por %p151, %p152
    %p154 = scmp.ne.s32.totalorder %s142, %s143
    %p155 = scmp.eq.s32.totalorder %s28, 1
    %p156 = por %p154, %p155
    %p158 = scmp.ne.s32.totalorder %s143, %s157
    %p159 = scmp.eq.s32.totalorder %s28, 0
    %p160 = por %p158, %p159
    %s162 = sadd.s32 %s161, 1
    %p165 = scmp.eq.s32.totalorder %s22, 1
    %p166 = scmp.ne.s32.totalorder %s161, %s163
    %p167 = scmp.eq.s32.totalorder %s22, 0
    %p168 = por %p166, %p167
    %p169 = scmp.ne.s32.totalorder %s161, %s163
    %p170 = scmp.eq.s32.totalorder %s27, 1
    %p171 = por %p169, %p170
    %p172 = scmp.ne.s32.totalorder %s163, %s164
    %p173 = scmp.eq.s32.totalorder %s27, 0
    %p174 = por %p172, %p173
    %p175 = scmp.ne.s32.totalorder %s163, %s164
    %p176 = scmp.eq.s32.totalorder %s28, 1
    %p177 = por %p175, %p176
    %p179 = scmp.ne.s32.totalorder %s164, %s178
    %p180 = scmp.eq.s32.totalorder %s28, 0
    %p181 = por %p179, %p180
    %s183 = sadd.s32 %s182, 1
    %p186 = scmp.eq.s32.totalorder %s22, 1
    %p187 = scmp.ne.s32.totalorder %s182, %s184
    %p188 = scmp.eq.s32.totalorder %s22, 0
    %p189 = por %p187, %p188
    %p190 = scmp.ne.s32.totalorder %s182, %s184
    %p191 = scmp.eq.s32.totalorder %s27, 1
    %p192 = por %p190, %p191
    %p193 = scmp.ne.s32.totalorder %s184, %s185
    %p194 = scmp.eq.s32.totalorder %s27, 0
    %p195 = por %p193, %p194
    %p196 = scmp.ne.s32.totalorder %s184, %s185
    %p197 = scmp.eq.s32.totalorder %s28, 1
    %p198 = por %p196, %p197
    %p200 = scmp.ne.s32.totalorder %s185, %s199
    %p201 = scmp.eq.s32.totalorder %s28, 0
    %p202 = por %p200, %p201
    %s204 = sadd.s32 %s203, 1
    %p207 = scmp.eq.s32.totalorder %s22, 1
    %p208 = scmp.ne.s32.totalorder %s203, %s205
    %p209 = scmp.eq.s32.totalorder %s22, 0
    %p210 = por %p208, %p209
    %p211 = scmp.ne.s32.totalorder %s203, %s205
    %p212 = scmp.eq.s32.totalorder %s27, 1
    %p213 = por %p211, %p212
    %p214 = scmp.ne.s32.totalorder %s205, %s206
    %p215 = scmp.eq.s32.totalorder %s27, 0
    %p216 = por %p214, %p215
    %p217 = scmp.ne.s32.totalorder %s205, %s206
    %p218 = scmp.eq.s32.totalorder %s28, 1
    %p219 = por %p217, %p218
    %p221 = scmp.ne.s32.totalorder %s206, %s220
    %p222 = scmp.eq.s32.totalorder %s28, 0
    %p223 = por %p221, %p222
    %s225 = sadd.s32 %s224, 1
    %p228 = scmp.eq.s32.totalorder %s22, 1
    %p229 = scmp.ne.s32.totalorder %s224, %s226
    %p230 = scmp.eq.s32.totalorder %s22, 0
    %p231 = por %p229, %p230
    %p232 = scmp.ne.s32.totalorder %s224, %s226
    %p233 = scmp.eq.s32.totalorder %s27, 1
    %p234 = por %p232, %p233
    %p235 = scmp.ne.s32.totalorder %s226, %s227
    %p236 = scmp.eq.s32.totalorder %s27, 0
    %p237 = por %p235, %p236
    %p238 = scmp.ne.s32.totalorder %s226, %s227
    %p239 = scmp.eq.s32.totalorder %s28, 1
    %p240 = por %p238, %p239
    %p242 = scmp.ne.s32.totalorder %s227, %s241
    %p243 = scmp.eq.s32.totalorder %s28, 0
    %p244 = por %p242, %p243
    %s246 = sadd.s32 %s245, 1
    %p249 = scmp.eq.s32.totalorder %s22, 1
    %p250 = scmp.ne.s32.totalorder %s245, %s247
    %p251 = scmp.eq.s32.totalorder %s22, 0
    %p252 = por %p250, %p251
    %p253 = scmp.ne.s32.totalorder %s245, %s247
    %p254 = scmp.eq.s32.totalorder %s27, 1
    %p255 = por %p253, %p254
    %p256 = scmp.ne.s32.totalorder %s247, %s248
    %p257 = scmp.eq.s32.totalorder %s27, 0
    %p258 = por %p256, %p257
    %p259 = scmp.ne.s32.totalorder %s247, %s248
    %p260 = scmp.eq.s32.totalorder %s28, 1
    %p261 = por %p259, %p260
    %p263 = scmp.ne.s32.totalorder %s248, %s262
    %p264 = scmp.eq.s32.totalorder %s28, 0
    %p265 = por %p263, %p264
    %s267 = sadd.s32 %s266, 1
    %p270 = scmp.eq.s32.totalorder %s22, 1
    %p271 = scmp.ne.s32.totalorder %s266, %s268
    %p272 = scmp.eq.s32.totalorder %s22, 0
    %p273 = por %p271, %p272
    %p274 = scmp.ne.s32.totalorder %s266, %s268
    %p275 = scmp.eq.s32.totalorder %s27, 1
    %p276 = por %p274, %p275
    %p277 = scmp.ne.s32.totalorder %s268, %s269
    %p278 = scmp.eq.s32.totalorder %s27, 0
    %p279 = por %p277, %p278
    %p280 = scmp.ne.s32.totalorder %s268, %s269
    %p281 = scmp.eq.s32.totalorder %s28, 1
    %p282 = por %p280, %p281
    %p284 = scmp.ne.s32.totalorder %s269, %s283
    %p285 = scmp.eq.s32.totalorder %s28, 0
    %p286 = por %p284, %p285
    %s288 = sadd.s32 %s287, 1
    %p291 = scmp.eq.s32.totalorder %s22, 1
    %p292 = scmp.ne.s32.totalorder %s287, %s289
    %p293 = scmp.eq.s32.totalorder %s22, 0
    %p294 = por %p292, %p293
    %p295 = scmp.ne.s32.totalorder %s287, %s289
    %p296 = scmp.eq.s32.totalorder %s27, 1
    %p297 = por %p295, %p296
    %p298 = scmp.ne.s32.totalorder %s289, %s290
    %p299 = scmp.eq.s32.totalorder %s27, 0
    %p300 = por %p298, %p299
    %p301 = scmp.ne.s32.totalorder %s289, %s290
    %p302 = scmp.eq.s32.totalorder %s28, 1
    %p303 = por %p301, %p302
    %p305 = scmp.ne.s32.totalorder %s290, %s304
    %p306 = scmp.eq.s32.totalorder %s28, 0
    %p307 = por %p305, %p306
    %s309 = sadd.s32 %s308, 1
    %p312 = scmp.eq.s32.totalorder %s22, 1
    %p313 = scmp.ne.s32.totalorder %s308, %s310
    %p314 = scmp.eq.s32.totalorder %s22, 0
    %p315 = por %p313, %p314
    %p316 = scmp.ne.s32.totalorder %s308, %s310
    %p317 = scmp.eq.s32.totalorder %s27, 1
    %p318 = por %p316, %p317
    %p319 = scmp.ne.s32.totalorder %s310, %s311
    %p320 = scmp.eq.s32.totalorder %s27, 0
    %p321 = por %p319, %p320
    %p322 = scmp.ne.s32.totalorder %s310, %s311
    %p323 = scmp.eq.s32.totalorder %s28, 1
    %p324 = por %p322, %p323
    %p326 = scmp.ne.s32.totalorder %s311, %s325
    %p327 = scmp.eq.s32.totalorder %s28, 0
    %p328 = por %p326, %p327
    %s329 = ssub.s32 %s22, %s29
    %p330 = scmp.eq.s32.totalorder %s329, 0
    %s332 = sadd.s32 %s331, 1
    %s333 = scalar_select %p330, %s331, %s332
    %p336 = pneg %p330
    %p337 = scmp.eq.s32.totalorder %s22, 1
    %p338 = por %p336, %p337
    %p339 = scmp.ne.s32.totalorder %s331, %s334
    %p340 = scmp.eq.s32.totalorder %s22, 0
    %p341 = por %p339, %p340
    %p342 = scmp.ne.s32.totalorder %s331, %s334
    %p343 = scmp.eq.s32.totalorder %s27, 1
    %p344 = por %p342, %p343
    %p345 = scmp.ne.s32.totalorder %s334, %s335
    %p346 = scmp.eq.s32.totalorder %s27, 0
    %p347 = por %p345, %p346
    %p348 = scmp.ne.s32.totalorder %s334, %s335
    %p349 = scmp.eq.s32.totalorder %s28, 1
    %p350 = por %p348, %p349
    %p352 = scmp.ne.s32.totalorder %s335, %s351
    %p353 = scmp.eq.s32.totalorder %s28, 0
    %p354 = por %p352, %p353
    %p355 = scmp.le.s32.totalorder 1, %s22
    %p356 = scmp.lt.s32.totalorder %s22, 3
    %p357 = pnand %p355, %p356
    %p358 = pneg %p357
    // Predicated region
    $region9: #{scse_block_forward.1} parent=5 // pred_check
      _
    $region10: #{scse_block_forward.1} parent=5 // pred_check_branch
      %360 = sbr.rel (%p357) target = $region12
    $region11: #{scse_block_forward.1} parent=5 // pred_region
      %s361 = ssub.s32 %s22, 1
      // Predicated region
      $region13: #{scse_block_forward.1} parent=11 // pred_check
        %p362 = pneg %p69
      $region14: #{scse_block_forward.1} parent=11 // pred_check_branch
        %364 = sbr.rel (%p362) target = $region16
      $region15: #{scse_block_forward.1} parent=11 // pred_region
        _
      $region16: #{scse_block_forward.1} parent=11 // pred_fallthru
        _
      // Predicated region
      $region17: #{scse_block_forward.1} parent=11 // pred_check
        %p365 = pneg %p90
      $region18: #{scse_block_forward.1} parent=11 // pred_check_branch
        %367 = sbr.rel (%p365) target = $region20
      $region19: #{scse_block_forward.1} parent=11 // pred_region
        _
      $region20: #{scse_block_forward.1} parent=11 // pred_fallthru
        _
      // Predicated region
      $region21: #{scse_block_forward.1} parent=11 // pred_check
        %p368 = pneg %p111
      $region22: #{scse_block_forward.1} parent=11 // pred_check_branch
        %370 = sbr.rel (%p368) target = $region24
      $region23: #{scse_block_forward.1} parent=11 // pred_region
        _
      $region24: #{scse_block_forward.1} parent=11 // pred_fallthru
        _
      // Predicated region
      $region25: #{scse_block_forward.1} parent=11 // pred_check
        %p371 = pneg %p132
      $region26: #{scse_block_forward.1} parent=11 // pred_check_branch
        %373 = sbr.rel (%p371) target = $region28
      $region27: #{scse_block_forward.1} parent=11 // pred_region
        _
      $region28: #{scse_block_forward.1} parent=11 // pred_fallthru
        _
      // Predicated region
      $region29: #{scse_block_forward.1} parent=11 // pred_check
        %p374 = pneg %p153
      $region30: #{scse_block_forward.1} parent=11 // pred_check_branch
        %376 = sbr.rel (%p374) target = $region32
      $region31: #{scse_block_forward.1} parent=11 // pred_region
        _
      $region32: #{scse_block_forward.1} parent=11 // pred_fallthru
        _
      // Predicated region
      $region33: #{scse_block_forward.1} parent=11 // pred_check
        %p377 = pneg %p174
      $region34: #{scse_block_forward.1} parent=11 // pred_check_branch
        %379 = sbr.rel (%p377) target = $region36
      $region35: #{scse_block_forward.1} parent=11 // pred_region
        _
      $region36: #{scse_block_forward.1} parent=11 // pred_fallthru
        _
      // Predicated region
      $region37: #{scse_block_forward.1} parent=11 // pred_check
        %p380 = pneg %p195
      $region38: #{scse_block_forward.1} parent=11 // pred_check_branch
        %382 = sbr.rel (%p380) target = $region40
      $region39: #{scse_block_forward.1} parent=11 // pred_region
        _
      $region40: #{scse_block_forward.1} parent=11 // pred_fallthru
        _
      // Predicated region
      $region41: #{scse_block_forward.1} parent=11 // pred_check
        %p383 = pneg %p216
      $region42: #{scse_block_forward.1} parent=11 // pred_check_branch
        %385 = sbr.rel (%p383) target = $region44
      $region43: #{scse_block_forward.1} parent=11 // pred_region
        _
      $region44: #{scse_block_forward.1} parent=11 // pred_fallthru
        _
      // Predicated region
      $region45: #{scse_block_forward.1} parent=11 // pred_check
        %p386 = pneg %p237
      $region46: #{scse_block_forward.1} parent=11 // pred_check_branch
        %388 = sbr.rel (%p386) target = $region48
      $region47: #{scse_block_forward.1} parent=11 // pred_region
        _
      $region48: #{scse_block_forward.1} parent=11 // pred_fallthru
        _
      // Predicated region
      $region49: #{scse_block_forward.1} parent=11 // pred_check
        %p389 = pneg %p258
      $region50: #{scse_block_forward.1} parent=11 // pred_check_branch
        %391 = sbr.rel (%p389) target = $region52
      $region51: #{scse_block_forward.1} parent=11 // pred_region
        _
      $region52: #{scse_block_forward.1} parent=11 // pred_fallthru
        _
      // Predicated region
      $region53: #{scse_block_forward.1} parent=11 // pred_check
        %p392 = pneg %p279
      $region54: #{scse_block_forward.1} parent=11 // pred_check_branch
        %394 = sbr.rel (%p392) target = $region56
      $region55: #{scse_block_forward.1} parent=11 // pred_region
        _
      $region56: #{scse_block_forward.1} parent=11 // pred_fallthru
        _
      // Predicated region
      $region57: #{scse_block_forward.1} parent=11 // pred_check
        %p395 = pneg %p300
      $region58: #{scse_block_forward.1} parent=11 // pred_check_branch
        %397 = sbr.rel (%p395) target = $region60
      $region59: #{scse_block_forward.1} parent=11 // pred_region
        _
      $region60: #{scse_block_forward.1} parent=11 // pred_fallthru
        _
      // Predicated region
      $region61: #{scse_block_forward.1} parent=11 // pred_check
        %p398 = pneg %p321
      $region62: #{scse_block_forward.1} parent=11 // pred_check_branch
        %400 = sbr.rel (%p398) target = $region64
      $region63: #{scse_block_forward.1} parent=11 // pred_region
        _
      $region64: #{scse_block_forward.1} parent=11 // pred_fallthru
        _
    $region12: #{scse_block_forward.1} parent=5 // pred_fallthru
      _
    %p401 = scmp.lt.s32.totalorder %s22, 2
    // Predicated region
    $region65: #{scse_block_forward.1} parent=5 // pred_check
      %p402 = pneg %p401
    $region66: #{scse_block_forward.1} parent=5 // pred_check_branch
      %404 = sbr.rel (%p402) target = $region68
    $region67: #{scse_block_forward.1} parent=5 // pred_region
      // Predicated region
      $region69: #{scse_block_forward.1} parent=67 // pred_check
        %p405 = pneg %p42
      $region70: #{scse_block_forward.1} parent=67 // pred_check_branch
        %407 = sbr.rel (%p405) target = $region72
      $region71: #{scse_block_forward.1} parent=67 // pred_region
        %s408 = smul.u32 2, %s22
        %p409 = scmp.lt.s32.totalorder %s408, 3
        %s410 = scalar_select %p409, %s408, 3
        %s411 = smul.addr %s410, 4
        %s412 = smul.addr %s411, 8
        %s413 = scalar_lea.vmem %s0, %s412
        %s414 = smul.u32 2, %s22
      $region72: #{scse_block_forward.1} parent=67 // pred_fallthru
        _
    $region68: #{scse_block_forward.1} parent=5 // pred_fallthru
      _
    %p415 = scmp.le.s32.totalorder 1, %s22
    %p416 = scmp.lt.s32.totalorder %s22, 3
    %p417 = pnand %p415, %p416
    %p418 = pneg %p417
    // Predicated region
    $region73: #{scse_block_forward.1} parent=5 // pred_check
      _
    $region74: #{scse_block_forward.1} parent=5 // pred_check_branch
      %420 = sbr.rel (%p417) target = $region76
    $region75: #{scse_block_forward.1} parent=5 // pred_region
      %s421 = ssub.s32 %s22, 1
      %s422 = smul.u32 2, %s27
      %p423 = scmp.lt.s32.totalorder %s422, 3
      %s424 = scalar_select %p423, %s422, 3
      %s425 = smul.addr %s424, 4
      %s426 = smul.addr %s425, 8
      %s427 = scalar_lea.vmem %s0, %s426
      %p428 = pneg %p48
      %p429 = pneg %p45
      %p430 = pneg %p69
      %p431 = pneg %p66
      %p432 = pneg %p90
      %p433 = pneg %p87
      %p434 = pneg %p111
      %p435 = pneg %p108
      %p436 = pneg %p132
      %p437 = pneg %p129
      %p438 = pneg %p153
      %p439 = pneg %p150
      %p440 = pneg %p174
      %p441 = pneg %p171
      %p442 = pneg %p195
      %p443 = pneg %p192
      %p444 = pneg %p216
      %p445 = pneg %p213
      %p446 = pneg %p237
      %p447 = pneg %p234
      %p448 = pneg %p258
      %p449 = pneg %p255
      %p450 = pneg %p279
      %p451 = pneg %p276
      %p452 = pneg %p300
      %p453 = pneg %p297
      %p454 = pneg %p321
      %p455 = pneg %p318
      %p456 = pneg %p347
      %p457 = pneg %p344
      %s458 = smul.u32 2, %s27
      %p459 = scmp.lt.s32.totalorder %s458, 3
      %s460 = scalar_select %p459, %s458, 3
      %s461 = smul.addr %s460, 4
      %s462 = smul.addr %s461, 8
      %s463 = scalar_lea.vmem %s14, %s462
      %s464 = smul.u32 2, %s27
      %p465 = scmp.lt.s32.totalorder %s464, 3
      %s466 = scalar_select %p465, %s464, 3
      %s467 = smul.addr %s466, 4
      %s468 = smul.addr %s467, 8
      %s469 = scalar_lea.vmem %s0, %s468
      %s470 = smul.u32 2, %s27
      %s471 = smul.u32 2, %s27
      %p472 = scmp.lt.s32.totalorder %s471, 3
      %s473 = scalar_select %p472, %s471, 3
      %s474 = smul.addr %s473, 4
      %s475 = smul.addr %s474, 8
      %s476 = scalar_lea.vmem %s14, %s475
      %s477 = smul.u32 2, %s27
      %v478 = vld [vmem:[%s469] sm:$0xff]
      %v479 = vld [vmem:[%s469 + $0x8] sm:$0xff]
      %v480 = vld [vmem:[%s469 + $0x10] sm:$0xff]
      %v481 = vld [vmem:[%s469 + $0x18] sm:$0xff]
      %s482 = scalar_lea.vmem %s469, 32
      %v483 = vld [vmem:[%s482] sm:$0xff]
      %v484 = vld [vmem:[%s482 + $0x8] sm:$0xff]
      %v485 = vld [vmem:[%s482 + $0x10] sm:$0xff]
      %v486 = vld [vmem:[%s482 + $0x18] sm:$0xff]
      %v487 = vld [vmem:[%s2] sm:$0xff]
      %v488 = vld [vmem:[%s2 + $0x8] sm:$0xff]
      %v489 = vld [vmem:[%s1] sm:$0xff]
      %v490 = vld [vmem:[%s1 + $0x8] sm:$0xff]
      %v491 = vld [vmem:[%s1 + $0x10] sm:$0xff]
      %v492 = vld [vmem:[%s1 + $0x18] sm:$0xff]
      %494 = vset.pattern.permute.xlu0 4
      %495 = vperm.xlu0 %494, %v487
      %v496 = vpop.permute.xlu0 %495
      %499 = vset.pattern.permute.xlu0 4
      %500 = vperm.xlu0 %499, %v488
      %v501 = vpop.permute.xlu0 %500
      %v503 = vmul.f32 %v478, %v496
      %v504 = vmul.f32 %v479, %v496
      %v505 = vmul.f32 %v483, %v496
      %v506 = vmul.f32 %v484, %v496
      %v507 = vmul.f32 %v480, %v501
      %v508 = vmul.f32 %v481, %v501
      %v509 = vmul.f32 %v485, %v501
      %v510 = vmul.f32 %v486, %v501
      %511 = vrot.lane.b32.xlu0 %v478, 17
      %v512 = vpop.permute.xlu0 %511
      %513 = vrot.lane.b32.xlu0 %v480, 17
      %v514 = vpop.permute.xlu0 %513
      %515 = vrot.lane.b32.xlu0 %v479, 17
      %v516 = vpop.permute.xlu0 %515
      %517 = vrot.lane.b32.xlu0 %v481, 17
      %v518 = vpop.permute.xlu0 %517
      %519 = vrot.lane.b32.xlu0 %v483, 17
      %v520 = vpop.permute.xlu0 %519
      %521 = vrot.lane.b32.xlu0 %v485, 17
      %v522 = vpop.permute.xlu0 %521
      %523 = vrot.lane.b32.xlu0 %v484, 17
      %v524 = vpop.permute.xlu0 %523
      %525 = vrot.lane.b32.xlu0 %v486, 17
      %v526 = vpop.permute.xlu0 %525
      %v527 = vlaneseq
      %v528 = vand.u32 %v527, 127
      %vm529 = vcmp.lt.s32.totalorder %v528, 17
      %v530 = vsel %vm529, %v520, %v524
      %v531 = vsel %vm529, %v522, %v526
      %v532 = vsel %vm529, %v516, %v520
      %v533 = vsel %vm529, %v518, %v522
      %v534 = vsel %vm529, %v512, %v516
      %v535 = vsel %vm529, %v514, %v518
      %v536 = vsel %vm529, %v524, %v512
      %v537 = vsel %vm529, %v526, %v514
      %v538 = vlaneseq
      %v539 = vshrl.u32 %v538, 7
      %v540 = vsub.s32 0, %v539
      %v541 = vrot.slane %v489, %v540
      %v542 = vlaneseq
      %v543 = vshrl.u32 %v542, 7
      %v544 = vsub.s32 0, %v543
      %v545 = vrot.slane %v490, %v544
      %v546 = vlaneseq
      %v547 = vshrl.u32 %v546, 7
      %v548 = vsub.s32 0, %v547
      %v549 = vrot.slane %v491, %v548
      %v550 = vlaneseq
      %v551 = vshrl.u32 %v550, 7
      %v552 = vsub.s32 0, %v551
      %v553 = vrot.slane %v492, %v552
      %v554 = vmul.f32 %v536, %v541
      %v555 = vmul.f32 %v534, %v545
      %v556 = vmul.f32 %v532, %v549
      %v557 = vmul.f32 %v530, %v553
      %v558 = vmul.f32 %v537, %v541
      %v559 = vmul.f32 %v535, %v545
      %v560 = vmul.f32 %v533, %v549
      %v561 = vmul.f32 %v531, %v553
      %562 = vset.pattern.permute.xlu0 0
      %563 = vperm.xlu0 %562, %v487
      %v564 = vpop.permute.xlu0 %563
      %566 = vset.pattern.permute.xlu0 0
      %567 = vperm.xlu0 %566, %v488
      %v568 = vpop.permute.xlu0 %567
      %v570 = vmul.f32 %v554, %v564
      %v571 = vmul.f32 %v555, %v564
      %v572 = vmul.f32 %v556, %v564
      %v573 = vmul.f32 %v557, %v564
      %v574 = vmul.f32 %v558, %v568
      %v575 = vmul.f32 %v559, %v568
      %v576 = vmul.f32 %v560, %v568
      %v577 = vmul.f32 %v561, %v568
      %v578 = vadd.f32 %v503, %v570
      %v579 = vadd.f32 %v504, %v571
      %v580 = vadd.f32 %v505, %v572
      %v581 = vadd.f32 %v506, %v573
      %v582 = vadd.f32 %v507, %v574
      %v583 = vadd.f32 %v508, %v575
      %v584 = vadd.f32 %v509, %v576
      %v585 = vadd.f32 %v510, %v577
      %586 = vrot.lane.b32.xlu0 %v478, 16
      %v587 = vpop.permute.xlu0 %586
      %588 = vrot.lane.b32.xlu0 %v480, 16
      %v589 = vpop.permute.xlu0 %588
      %590 = vrot.lane.b32.xlu0 %v479, 16
      %v591 = vpop.permute.xlu0 %590
      %592 = vrot.lane.b32.xlu0 %v481, 16
      %v593 = vpop.permute.xlu0 %592
      %594 = vrot.lane.b32.xlu0 %v483, 16
      %v595 = vpop.permute.xlu0 %594
      %596 = vrot.lane.b32.xlu0 %v485, 16
      %v597 = vpop.permute.xlu0 %596
      %598 = vrot.lane.b32.xlu0 %v484, 16
      %v599 = vpop.permute.xlu0 %598
      %600 = vrot.lane.b32.xlu0 %v486, 16
      %v601 = vpop.permute.xlu0 %600
      %vm602 = vcmp.lt.s32.totalorder %v528, 16
      %v603 = vsel %vm602, %v595, %v599
      %v604 = vsel %vm602, %v597, %v601
      %v605 = vsel %vm602, %v591, %v595
      %v606 = vsel %vm602, %v593, %v597
      %v607 = vsel %vm602, %v587, %v591
      %v608 = vsel %vm602, %v589, %v593
      %v609 = vsel %vm602, %v599, %v587
      %v610 = vsel %vm602, %v601, %v589
      %v611 = vlaneseq
      %v612 = vshrl.u32 %v611, 7
      %v613 = vsub.s32 1, %v612
      %v614 = vrot.slane %v489, %v613
      %v615 = vlaneseq
      %v616 = vshrl.u32 %v615, 7
      %v617 = vsub.s32 1, %v616
      %v618 = vrot.slane %v490, %v617
      %v619 = vlaneseq
      %v620 = vshrl.u32 %v619, 7
      %v621 = vsub.s32 1, %v620
      %v622 = vrot.slane %v491, %v621
      %v623 = vlaneseq
      %v624 = vshrl.u32 %v623, 7
      %v625 = vsub.s32 1, %v624
      %v626 = vrot.slane %v492, %v625
      %v627 = vmul.f32 %v609, %v614
      %v628 = vmul.f32 %v607, %v618
      %v629 = vmul.f32 %v605, %v622
      %v630 = vmul.f32 %v603, %v626
      %v631 = vmul.f32 %v610, %v614
      %v632 = vmul.f32 %v608, %v618
      %v633 = vmul.f32 %v606, %v622
      %v634 = vmul.f32 %v604, %v626
      %635 = vset.pattern.permute.xlu0 1
      %636 = vperm.xlu0 %635, %v487
      %v637 = vpop.permute.xlu0 %636
      %639 = vset.pattern.permute.xlu0 1
      %640 = vperm.xlu0 %639, %v488
      %v641 = vpop.permute.xlu0 %640
      %v643 = vmul.f32 %v627, %v637
      %v644 = vmul.f32 %v628, %v637
      %v645 = vmul.f32 %v629, %v637
      %v646 = vmul.f32 %v630, %v637
      %v647 = vmul.f32 %v631, %v641
      %v648 = vmul.f32 %v632, %v641
      %v649 = vmul.f32 %v633, %v641
      %v650 = vmul.f32 %v634, %v641
      %v651 = vadd.f32 %v578, %v643
      %v652 = vadd.f32 %v579, %v644
      %v653 = vadd.f32 %v580, %v645
      %v654 = vadd.f32 %v581, %v646
      %v655 = vadd.f32 %v582, %v647
      %v656 = vadd.f32 %v583, %v648
      %v657 = vadd.f32 %v584, %v649
      %v658 = vadd.f32 %v585, %v650
      %659 = vrot.lane.b32.xlu0 %v478, 15
      %v660 = vpop.permute.xlu0 %659
      %661 = vrot.lane.b32.xlu0 %v480, 15
      %v662 = vpop.permute.xlu0 %661
      %663 = vrot.lane.b32.xlu0 %v479, 15
      %v664 = vpop.permute.xlu0 %663
      %665 = vrot.lane.b32.xlu0 %v481, 15
      %v666 = vpop.permute.xlu0 %665
      %667 = vrot.lane.b32.xlu0 %v483, 15
      %v668 = vpop.permute.xlu0 %667
      %669 = vrot.lane.b32.xlu0 %v485, 15
      %v670 = vpop.permute.xlu0 %669
      %671 = vrot.lane.b32.xlu0 %v484, 15
      %v672 = vpop.permute.xlu0 %671
      %673 = vrot.lane.b32.xlu0 %v486, 15
      %v674 = vpop.permute.xlu0 %673
      %vm675 = vcmp.lt.s32.totalorder %v528, 15
      %v676 = vsel %vm675, %v668, %v672
      %v677 = vsel %vm675, %v670, %v674
      %v678 = vsel %vm675, %v664, %v668
      %v679 = vsel %vm675, %v666, %v670
      %v680 = vsel %vm675, %v660, %v664
      %v681 = vsel %vm675, %v662, %v666
      %v682 = vsel %vm675, %v672, %v660
      %v683 = vsel %vm675, %v674, %v662
      %v684 = vlaneseq
      %v685 = vshrl.u32 %v684, 7
      %v686 = vsub.s32 2, %v685
      %v687 = vrot.slane %v489, %v686
      %v688 = vlaneseq
      %v689 = vshrl.u32 %v688, 7
      %v690 = vsub.s32 2, %v689
      %v691 = vrot.slane %v490, %v690
      %v692 = vlaneseq
      %v693 = vshrl.u32 %v692, 7
      %v694 = vsub.s32 2, %v693
      %v695 = vrot.slane %v491, %v694
      %v696 = vlaneseq
      %v697 = vshrl.u32 %v696, 7
      %v698 = vsub.s32 2, %v697
      %v699 = vrot.slane %v492, %v698
      %v700 = vmul.f32 %v682, %v687
      %v701 = vmul.f32 %v680, %v691
      %v702 = vmul.f32 %v678, %v695
      %v703 = vmul.f32 %v676, %v699
      %v704 = vmul.f32 %v683, %v687
      %v705 = vmul.f32 %v681, %v691
      %v706 = vmul.f32 %v679, %v695
      %v707 = vmul.f32 %v677, %v699
      %708 = vset.pattern.permute.xlu0 2
      %709 = vperm.xlu0 %708, %v487
      %v710 = vpop.permute.xlu0 %709
      %712 = vset.pattern.permute.xlu0 2
      %713 = vperm.xlu0 %712, %v488
      %v714 = vpop.permute.xlu0 %713
      %v716 = vmul.f32 %v700, %v710
      %v717 = vmul.f32 %v701, %v710
      %v718 = vmul.f32 %v702, %v710
      %v719 = vmul.f32 %v703, %v710
      %v720 = vmul.f32 %v704, %v714
      %v721 = vmul.f32 %v705, %v714
      %v722 = vmul.f32 %v706, %v714
      %v723 = vmul.f32 %v707, %v714
      %v724 = vadd.f32 %v651, %v716
      %v725 = vadd.f32 %v652, %v717
      %v726 = vadd.f32 %v653, %v718
      %v727 = vadd.f32 %v654, %v719
      %v728 = vadd.f32 %v655, %v720
      %v729 = vadd.f32 %v656, %v721
      %v730 = vadd.f32 %v657, %v722
      %v731 = vadd.f32 %v658, %v723
      %732 = vrot.lane.b32.xlu0 %v478, 1
      %v733 = vpop.permute.xlu0 %732
      %734 = vrot.lane.b32.xlu0 %v480, 1
      %v735 = vpop.permute.xlu0 %734
      %736 = vrot.lane.b32.xlu0 %v479, 1
      %v737 = vpop.permute.xlu0 %736
      %738 = vrot.lane.b32.xlu0 %v481, 1
      %v739 = vpop.permute.xlu0 %738
      %740 = vrot.lane.b32.xlu0 %v483, 1
      %v741 = vpop.permute.xlu0 %740
      %742 = vrot.lane.b32.xlu0 %v485, 1
      %v743 = vpop.permute.xlu0 %742
      %744 = vrot.lane.b32.xlu0 %v484, 1
      %v745 = vpop.permute.xlu0 %744
      %746 = vrot.lane.b32.xlu0 %v486, 1
      %v747 = vpop.permute.xlu0 %746
      %vm748 = vcmp.lt.s32.totalorder %v528, 1
      %v749 = vsel %vm748, %v741, %v745
      %v750 = vsel %vm748, %v743, %v747
      %v751 = vsel %vm748, %v737, %v741
      %v752 = vsel %vm748, %v739, %v743
      %v753 = vsel %vm748, %v733, %v737
      %v754 = vsel %vm748, %v735, %v739
      %v755 = vsel %vm748, %v745, %v733
      %v756 = vsel %vm748, %v747, %v735
      %v757 = vlaneseq
      %v758 = vshrl.u32 %v757, 7
      %v759 = vsub.s32 3, %v758
      %v760 = vrot.slane %v489, %v759
      %v761 = vlaneseq
      %v762 = vshrl.u32 %v761, 7
      %v763 = vsub.s32 3, %v762
      %v764 = vrot.slane %v490, %v763
      %v765 = vlaneseq
      %v766 = vshrl.u32 %v765, 7
      %v767 = vsub.s32 3, %v766
      %v768 = vrot.slane %v491, %v767
      %v769 = vlaneseq
      %v770 = vshrl.u32 %v769, 7
      %v771 = vsub.s32 3, %v770
      %v772 = vrot.slane %v492, %v771
      %v773 = vmul.f32 %v755, %v760
      %v774 = vmul.f32 %v753, %v764
      %v775 = vmul.f32 %v751, %v768
      %v776 = vmul.f32 %v749, %v772
      %v777 = vmul.f32 %v756, %v760
      %v778 = vmul.f32 %v754, %v764
      %v779 = vmul.f32 %v752, %v768
      %v780 = vmul.f32 %v750, %v772
      %781 = vset.pattern.permute.xlu0 3
      %782 = vperm.xlu0 %781, %v487
      %v783 = vpop.permute.xlu0 %782
      %785 = vset.pattern.permute.xlu0 3
      %786 = vperm.xlu0 %785, %v488
      %v787 = vpop.permute.xlu0 %786
      %v789 = vmul.f32 %v773, %v783
      %v790 = vmul.f32 %v774, %v783
      %v791 = vmul.f32 %v775, %v783
      %v792 = vmul.f32 %v776, %v783
      %v793 = vmul.f32 %v777, %v787
      %v794 = vmul.f32 %v778, %v787
      %v795 = vmul.f32 %v779, %v787
      %v796 = vmul.f32 %v780, %v787
      %v797 = vadd.f32 %v724, %v789
      %v798 = vadd.f32 %v725, %v790
      %v799 = vadd.f32 %v726, %v791
      %v800 = vadd.f32 %v727, %v792
      %v801 = vadd.f32 %v728, %v793
      %v802 = vadd.f32 %v729, %v794
      %v803 = vadd.f32 %v730, %v795
      %v804 = vadd.f32 %v731, %v796
      %805 = vrot.lane.b32.xlu0 %v478, 127
      %v806 = vpop.permute.xlu0 %805
      %807 = vrot.lane.b32.xlu0 %v480, 127
      %v808 = vpop.permute.xlu0 %807
      %809 = vrot.lane.b32.xlu0 %v479, 127
      %v810 = vpop.permute.xlu0 %809
      %811 = vrot.lane.b32.xlu0 %v481, 127
      %v812 = vpop.permute.xlu0 %811
      %813 = vrot.lane.b32.xlu0 %v483, 127
      %v814 = vpop.permute.xlu0 %813
      %815 = vrot.lane.b32.xlu0 %v485, 127
      %v816 = vpop.permute.xlu0 %815
      %817 = vrot.lane.b32.xlu0 %v484, 127
      %v818 = vpop.permute.xlu0 %817
      %819 = vrot.lane.b32.xlu0 %v486, 127
      %v820 = vpop.permute.xlu0 %819
      %vm821 = vcmp.lt.s32.totalorder %v528, 127
      %v822 = vsel %vm821, %v814, %v818
      %v823 = vsel %vm821, %v816, %v820
      %v824 = vsel %vm821, %v810, %v814
      %v825 = vsel %vm821, %v812, %v816
      %v826 = vsel %vm821, %v806, %v810
      %v827 = vsel %vm821, %v808, %v812
      %v828 = vsel %vm821, %v818, %v806
      %v829 = vsel %vm821, %v820, %v808
      %v830 = vlaneseq
      %v831 = vshrl.u32 %v830, 7
      %v832 = vsub.s32 4, %v831
      %v833 = vrot.slane %v489, %v832
      %v834 = vlaneseq
      %v835 = vshrl.u32 %v834, 7
      %v836 = vsub.s32 4, %v835
      %v837 = vrot.slane %v490, %v836
      %v838 = vlaneseq
      %v839 = vshrl.u32 %v838, 7
      %v840 = vsub.s32 4, %v839
      %v841 = vrot.slane %v491, %v840
      %v842 = vlaneseq
      %v843 = vshrl.u32 %v842, 7
      %v844 = vsub.s32 4, %v843
      %v845 = vrot.slane %v492, %v844
      %v846 = vmul.f32 %v826, %v833
      %v847 = vmul.f32 %v824, %v837
      %v848 = vmul.f32 %v822, %v841
      %v849 = vmul.f32 %v828, %v845
      %v850 = vmul.f32 %v827, %v833
      %v851 = vmul.f32 %v825, %v837
      %v852 = vmul.f32 %v823, %v841
      %v853 = vmul.f32 %v829, %v845
      %854 = vset.pattern.permute.xlu0 5
      %855 = vperm.xlu0 %854, %v487
      %v856 = vpop.permute.xlu0 %855
      %858 = vset.pattern.permute.xlu0 5
      %859 = vperm.xlu0 %858, %v488
      %v860 = vpop.permute.xlu0 %859
      %v862 = vmul.f32 %v846, %v856
      %v863 = vmul.f32 %v847, %v856
      %v864 = vmul.f32 %v848, %v856
      %v865 = vmul.f32 %v849, %v856
      %v866 = vmul.f32 %v850, %v860
      %v867 = vmul.f32 %v851, %v860
      %v868 = vmul.f32 %v852, %v860
      %v869 = vmul.f32 %v853, %v860
      %v870 = vadd.f32 %v797, %v862
      %v871 = vadd.f32 %v798, %v863
      %v872 = vadd.f32 %v799, %v864
      %v873 = vadd.f32 %v800, %v865
      %v874 = vadd.f32 %v801, %v866
      %v875 = vadd.f32 %v802, %v867
      %v876 = vadd.f32 %v803, %v868
      %v877 = vadd.f32 %v804, %v869
      %878 = vrot.lane.b32.xlu0 %v478, 113
      %v879 = vpop.permute.xlu0 %878
      %880 = vrot.lane.b32.xlu0 %v480, 113
      %v881 = vpop.permute.xlu0 %880
      %882 = vrot.lane.b32.xlu0 %v479, 113
      %v883 = vpop.permute.xlu0 %882
      %884 = vrot.lane.b32.xlu0 %v481, 113
      %v885 = vpop.permute.xlu0 %884
      %886 = vrot.lane.b32.xlu0 %v483, 113
      %v887 = vpop.permute.xlu0 %886
      %888 = vrot.lane.b32.xlu0 %v485, 113
      %v889 = vpop.permute.xlu0 %888
      %890 = vrot.lane.b32.xlu0 %v484, 113
      %v891 = vpop.permute.xlu0 %890
      %892 = vrot.lane.b32.xlu0 %v486, 113
      %v893 = vpop.permute.xlu0 %892
      %vm894 = vcmp.lt.s32.totalorder %v528, 113
      %v895 = vsel %vm894, %v887, %v891
      %v896 = vsel %vm894, %v889, %v893
      %v897 = vsel %vm894, %v883, %v887
      %v898 = vsel %vm894, %v885, %v889
      %v899 = vsel %vm894, %v879, %v883
      %v900 = vsel %vm894, %v881, %v885
      %v901 = vsel %vm894, %v891, %v879
      %v902 = vsel %vm894, %v893, %v881
      %v903 = vlaneseq
      %v904 = vshrl.u32 %v903, 7
      %v905 = vsub.s32 5, %v904
      %v906 = vrot.slane %v489, %v905
      %v907 = vlaneseq
      %v908 = vshrl.u32 %v907, 7
      %v909 = vsub.s32 5, %v908
      %v910 = vrot.slane %v490, %v909
      %v911 = vlaneseq
      %v912 = vshrl.u32 %v911, 7
      %v913 = vsub.s32 5, %v912
      %v914 = vrot.slane %v491, %v913
      %v915 = vlaneseq
      %v916 = vshrl.u32 %v915, 7
      %v917 = vsub.s32 5, %v916
      %v918 = vrot.slane %v492, %v917
      %v919 = vmul.f32 %v899, %v906
      %v920 = vmul.f32 %v897, %v910
      %v921 = vmul.f32 %v895, %v914
      %v922 = vmul.f32 %v901, %v918
      %v923 = vmul.f32 %v900, %v906
      %v924 = vmul.f32 %v898, %v910
      %v925 = vmul.f32 %v896, %v914
      %v926 = vmul.f32 %v902, %v918
      %927 = vset.pattern.permute.xlu0 6
      %928 = vperm.xlu0 %927, %v487
      %v929 = vpop.permute.xlu0 %928
      %931 = vset.pattern.permute.xlu0 6
      %932 = vperm.xlu0 %931, %v488
      %v933 = vpop.permute.xlu0 %932
      %v935 = vmul.f32 %v919, %v929
      %v936 = vmul.f32 %v920, %v929
      %v937 = vmul.f32 %v921, %v929
      %v938 = vmul.f32 %v922, %v929
      %v939 = vmul.f32 %v923, %v933
      %v940 = vmul.f32 %v924, %v933
      %v941 = vmul.f32 %v925, %v933
      %v942 = vmul.f32 %v926, %v933
      %v943 = vadd.f32 %v870, %v935
      %v944 = vadd.f32 %v871, %v936
      %v945 = vadd.f32 %v872, %v937
      %v946 = vadd.f32 %v873, %v938
      %v947 = vadd.f32 %v874, %v939
      %v948 = vadd.f32 %v875, %v940
      %v949 = vadd.f32 %v876, %v941
      %v950 = vadd.f32 %v877, %v942
      %951 = vrot.lane.b32.xlu0 %v478, 112
      %v952 = vpop.permute.xlu0 %951
      %953 = vrot.lane.b32.xlu0 %v480, 112
      %v954 = vpop.permute.xlu0 %953
      %955 = vrot.lane.b32.xlu0 %v479, 112
      %v956 = vpop.permute.xlu0 %955
      %957 = vrot.lane.b32.xlu0 %v481, 112
      %v958 = vpop.permute.xlu0 %957
      %959 = vrot.lane.b32.xlu0 %v483, 112
      %v960 = vpop.permute.xlu0 %959
      %961 = vrot.lane.b32.xlu0 %v485, 112
      %v962 = vpop.permute.xlu0 %961
      %963 = vrot.lane.b32.xlu0 %v484, 112
      %v964 = vpop.permute.xlu0 %963
      %965 = vrot.lane.b32.xlu0 %v486, 112
      %v966 = vpop.permute.xlu0 %965
      %vm967 = vcmp.lt.s32.totalorder %v528, 112
      %v968 = vsel %vm967, %v960, %v964
      %v969 = vsel %vm967, %v962, %v966
      %v970 = vsel %vm967, %v956, %v960
      %v971 = vsel %vm967, %v958, %v962
      %v972 = vsel %vm967, %v952, %v956
      %v973 = vsel %vm967, %v954, %v958
      %v974 = vsel %vm967, %v964, %v952
      %v975 = vsel %vm967, %v966, %v954
      %v976 = vlaneseq
      %v977 = vshrl.u32 %v976, 7
      %v978 = vsub.s32 6, %v977
      %v979 = vrot.slane %v489, %v978
      %v980 = vlaneseq
      %v981 = vshrl.u32 %v980, 7
      %v982 = vsub.s32 6, %v981
      %v983 = vrot.slane %v490, %v982
      %v984 = vlaneseq
      %v985 = vshrl.u32 %v984, 7
      %v986 = vsub.s32 6, %v985
      %v987 = vrot.slane %v491, %v986
      %v988 = vlaneseq
      %v989 = vshrl.u32 %v988, 7
      %v990 = vsub.s32 6, %v989
      %v991 = vrot.slane %v492, %v990
      %v992 = vmul.f32 %v972, %v979
      %v993 = vmul.f32 %v970, %v983
      %v994 = vmul.f32 %v968, %v987
      %v995 = vmul.f32 %v974, %v991
      %v996 = vmul.f32 %v973, %v979
      %v997 = vmul.f32 %v971, %v983
      %v998 = vmul.f32 %v969, %v987
      %v999 = vmul.f32 %v975, %v991
      %1000 = vset.pattern.permute.xlu0 7
      %1001 = vperm.xlu0 %1000, %v487
      %v1002 = vpop.permute.xlu0 %1001
      %1004 = vset.pattern.permute.xlu0 7
      %1005 = vperm.xlu0 %1004, %v488
      %v1006 = vpop.permute.xlu0 %1005
      %v1008 = vmul.f32 %v992, %v1002
      %v1009 = vmul.f32 %v993, %v1002
      %v1010 = vmul.f32 %v994, %v1002
      %v1011 = vmul.f32 %v995, %v1002
      %v1012 = vmul.f32 %v996, %v1006
      %v1013 = vmul.f32 %v997, %v1006
      %v1014 = vmul.f32 %v998, %v1006
      %v1015 = vmul.f32 %v999, %v1006
      %v1016 = vadd.f32 %v943, %v1008
      %v1017 = vadd.f32 %v944, %v1009
      %v1018 = vadd.f32 %v945, %v1010
      %v1019 = vadd.f32 %v946, %v1011
      %v1020 = vadd.f32 %v947, %v1012
      %v1021 = vadd.f32 %v948, %v1013
      %v1022 = vadd.f32 %v949, %v1014
      %v1023 = vadd.f32 %v950, %v1015
      %1024 = vrot.lane.b32.xlu0 %v478, 111
      %v1025 = vpop.permute.xlu0 %1024
      %1026 = vrot.lane.b32.xlu0 %v480, 111
      %v1027 = vpop.permute.xlu0 %1026
      %1028 = vrot.lane.b32.xlu0 %v479, 111
      %v1029 = vpop.permute.xlu0 %1028
      %1030 = vrot.lane.b32.xlu0 %v481, 111
      %v1031 = vpop.permute.xlu0 %1030
      %1032 = vrot.lane.b32.xlu0 %v483, 111
      %v1033 = vpop.permute.xlu0 %1032
      %1034 = vrot.lane.b32.xlu0 %v485, 111
      %v1035 = vpop.permute.xlu0 %1034
      %1036 = vrot.lane.b32.xlu0 %v484, 111
      %v1037 = vpop.permute.xlu0 %1036
      %1038 = vrot.lane.b32.xlu0 %v486, 111
      %v1039 = vpop.permute.xlu0 %1038
      %vm1040 = vcmp.lt.s32.totalorder %v528, 111
      %v1041 = vsel %vm1040, %v1033, %v1037
      %v1042 = vsel %vm1040, %v1035, %v1039
      %v1043 = vsel %vm1040, %v1029, %v1033
      %v1044 = vsel %vm1040, %v1031, %v1035
      %v1045 = vsel %vm1040, %v1025, %v1029
      %v1046 = vsel %vm1040, %v1027, %v1031
      %v1047 = vsel %vm1040, %v1037, %v1025
      %v1048 = vsel %vm1040, %v1039, %v1027
      %v1049 = vlaneseq
      %v1050 = vshrl.u32 %v1049, 7
      %v1051 = vsub.s32 7, %v1050
      %v1052 = vrot.slane %v489, %v1051
      %v1053 = vlaneseq
      %v1054 = vshrl.u32 %v1053, 7
      %v1055 = vsub.s32 7, %v1054
      %v1056 = vrot.slane %v490, %v1055
      %v1057 = vlaneseq
      %v1058 = vshrl.u32 %v1057, 7
      %v1059 = vsub.s32 7, %v1058
      %v1060 = vrot.slane %v491, %v1059
      %v1061 = vlaneseq
      %v1062 = vshrl.u32 %v1061, 7
      %v1063 = vsub.s32 7, %v1062
      %v1064 = vrot.slane %v492, %v1063
      %v1065 = vmul.f32 %v1045, %v1052
      %v1066 = vmul.f32 %v1043, %v1056
      %v1067 = vmul.f32 %v1041, %v1060
      %v1068 = vmul.f32 %v1047, %v1064
      %v1069 = vmul.f32 %v1046, %v1052
      %v1070 = vmul.f32 %v1044, %v1056
      %v1071 = vmul.f32 %v1042, %v1060
      %v1072 = vmul.f32 %v1048, %v1064
      %1073 = vset.pattern.permute.xlu0 8
      %1074 = vperm.xlu0 %1073, %v487
      %v1075 = vpop.permute.xlu0 %1074
      %1077 = vset.pattern.permute.xlu0 8
      %1078 = vperm.xlu0 %1077, %v488
      %v1079 = vpop.permute.xlu0 %1078
      %v1081 = vmul.f32 %v1065, %v1075
      %v1082 = vmul.f32 %v1066, %v1075
      %v1083 = vmul.f32 %v1067, %v1075
      %v1084 = vmul.f32 %v1068, %v1075
      %v1085 = vmul.f32 %v1069, %v1079
      %v1086 = vmul.f32 %v1070, %v1079
      %v1087 = vmul.f32 %v1071, %v1079
      %v1088 = vmul.f32 %v1072, %v1079
      %v1089 = vadd.f32 %v1016, %v1081
      %v1090 = vadd.f32 %v1017, %v1082
      %v1091 = vadd.f32 %v1018, %v1083
      %v1092 = vadd.f32 %v1019, %v1084
      %v1093 = vadd.f32 %v1020, %v1085
      %v1094 = vadd.f32 %v1021, %v1086
      %v1095 = vadd.f32 %v1022, %v1087
      %v1096 = vadd.f32 %v1023, %v1088
      %v1097 = vld [vmem:[%s3] sm:$0xff]
      %v1098 = vld [vmem:[%s3 + $0x8] sm:$0xff]
      %1100 = vset.pattern.permute.xlu0 0
      %1101 = vperm.xlu0 %1100, %v1097
      %v1102 = vpop.permute.xlu0 %1101
      %1105 = vset.pattern.permute.xlu0 0
      %1106 = vperm.xlu0 %1105, %v1098
      %v1107 = vpop.permute.xlu0 %1106
      %v1109 = vadd.f32 %v1089, %v1102
      %v1110 = vadd.f32 %v1090, %v1102
      %v1111 = vadd.f32 %v1091, %v1102
      %v1112 = vadd.f32 %v1092, %v1102
      %v1113 = vadd.f32 %v1093, %v1107
      %v1114 = vadd.f32 %v1094, %v1107
      %v1115 = vadd.f32 %v1095, %v1107
      %v1116 = vadd.f32 %v1096, %v1107
      %v1117 = vld [vmem:[%s4] sm:$0xff]
      %v1118 = vld [vmem:[%s4 + $0x8] sm:$0xff]
      %v1119 = vld [vmem:[%s5] sm:$0xff]
      %v1120 = vld [vmem:[%s5 + $0x8] sm:$0xff]
      %v1121 = vadd.f32 %v1109, %v1113
      %v1122 = vrot.slane %v1121, 4
      %v1123 = vadd.f32 %v1121, %v1122
      %v1124 = vrot.slane %v1123, 2
      %v1125 = vadd.f32 %v1123, %v1124
      %v1126 = vrot.slane %v1125, 1
      %v1127 = vadd.f32 %v1125, %v1126
      %v1128 = vadd.f32 %v1110, %v1114
      %v1129 = vrot.slane %v1128, 4
      %v1130 = vadd.f32 %v1128, %v1129
      %v1131 = vrot.slane %v1130, 2
      %v1132 = vadd.f32 %v1130, %v1131
      %v1133 = vrot.slane %v1132, 1
      %v1134 = vadd.f32 %v1132, %v1133
      %v1135 = vadd.f32 %v1111, %v1115
      %v1136 = vrot.slane %v1135, 4
      %v1137 = vadd.f32 %v1135, %v1136
      %v1138 = vrot.slane %v1137, 2
      %v1139 = vadd.f32 %v1137, %v1138
      %v1140 = vrot.slane %v1139, 1
      %v1141 = vadd.f32 %v1139, %v1140
      %v1142 = vadd.f32 %v1112, %v1116
      %v1143 = vrot.slane %v1142, 4
      %v1144 = vadd.f32 %v1142, %v1143
      %v1145 = vrot.slane %v1144, 2
      %v1146 = vadd.f32 %v1144, %v1145
      %v1147 = vrot.slane %v1146, 1
      %v1148 = vadd.f32 %v1146, %v1147
      %v1149 = vrcp.pop 16.0
      %v1150 = vmul.f32 %v1127, %v1149
      %v1151 = vmul.f32 %v1134, %v1149
      %v1152 = vmul.f32 %v1141, %v1149
      %v1153 = vmul.f32 %v1148, %v1149
      %v1154 = vsub.f32 %v1109, %v1150
      %v1155 = vsub.f32 %v1110, %v1151
      %v1156 = vsub.f32 %v1111, %v1152
      %v1157 = vsub.f32 %v1112, %v1153
      %v1158 = vsub.f32 %v1113, %v1150
      %v1159 = vsub.f32 %v1114, %v1151
      %v1160 = vsub.f32 %v1115, %v1152
      %v1161 = vsub.f32 %v1116, %v1153
      %v1162 = vmul.f32 %v1154, %v1154
      %v1163 = vmul.f32 %v1155, %v1155
      %v1164 = vmul.f32 %v1156, %v1156
      %v1165 = vmul.f32 %v1157, %v1157
      %v1166 = vmul.f32 %v1158, %v1158
      %v1167 = vmul.f32 %v1159, %v1159
      %v1168 = vmul.f32 %v1160, %v1160
      %v1169 = vmul.f32 %v1161, %v1161
      %v1170 = vadd.f32 %v1162, %v1166
      %v1171 = vrot.slane %v1170, 4
      %v1172 = vadd.f32 %v1170, %v1171
      %v1173 = vrot.slane %v1172, 2
      %v1174 = vadd.f32 %v1172, %v1173
      %v1175 = vrot.slane %v1174, 1
      %v1176 = vadd.f32 %v1174, %v1175
      %v1177 = vadd.f32 %v1163, %v1167
      %v1178 = vrot.slane %v1177, 4
      %v1179 = vadd.f32 %v1177, %v1178
      %v1180 = vrot.slane %v1179, 2
      %v1181 = vadd.f32 %v1179, %v1180
      %v1182 = vrot.slane %v1181, 1
      %v1183 = vadd.f32 %v1181, %v1182
      %v1184 = vadd.f32 %v1164, %v1168
      %v1185 = vrot.slane %v1184, 4
      %v1186 = vadd.f32 %v1184, %v1185
      %v1187 = vrot.slane %v1186, 2
      %v1188 = vadd.f32 %v1186, %v1187
      %v1189 = vrot.slane %v1188, 1
      %v1190 = vadd.f32 %v1188, %v1189
      %v1191 = vadd.f32 %v1165, %v1169
      %v1192 = vrot.slane %v1191, 4
      %v1193 = vadd.f32 %v1191, %v1192
      %v1194 = vrot.slane %v1193, 2
      %v1195 = vadd.f32 %v1193, %v1194
      %v1196 = vrot.slane %v1195, 1
      %v1197 = vadd.f32 %v1195, %v1196
      %v1198 = vmul.f32 %v1176, %v1149
      %v1199 = vmul.f32 %v1183, %v1149
      %v1200 = vmul.f32 %v1190, %v1149
      %v1201 = vmul.f32 %v1197, %v1149
      %v1202 = vadd.f32 %v1198, 1e-05
      %v1203 = vadd.f32 %v1199, 1e-05
      %v1204 = vadd.f32 %v1200, 1e-05
      %v1205 = vadd.f32 %v1201, 1e-05
      %v1206 = vrsqrt.pop %v1202
      %v1207 = vrsqrt.pop %v1203
      %v1208 = vrsqrt.pop %v1204
      %v1209 = vrsqrt.pop %v1205
      %v1210 = vmul.f32 %v1154, %v1206
      %v1211 = vmul.f32 %v1155, %v1207
      %v1212 = vmul.f32 %v1156, %v1208
      %v1213 = vmul.f32 %v1157, %v1209
      %v1214 = vmul.f32 %v1158, %v1206
      %v1215 = vmul.f32 %v1159, %v1207
      %v1216 = vmul.f32 %v1160, %v1208
      %v1217 = vmul.f32 %v1161, %v1209
      %1219 = vset.pattern.permute.xlu0 0
      %1220 = vperm.xlu0 %1219, %v1117
      %v1221 = vpop.permute.xlu0 %1220
      %1224 = vset.pattern.permute.xlu0 0
      %1225 = vperm.xlu0 %1224, %v1118
      %v1226 = vpop.permute.xlu0 %1225
      %v1228 = vmul.f32 %v1210, %v1221
      %v1229 = vmul.f32 %v1211, %v1221
      %v1230 = vmul.f32 %v1212, %v1221
      %v1231 = vmul.f32 %v1213, %v1221
      %v1232 = vmul.f32 %v1214, %v1226
      %v1233 = vmul.f32 %v1215, %v1226
      %v1234 = vmul.f32 %v1216, %v1226
      %v1235 = vmul.f32 %v1217, %v1226
      %1237 = vset.pattern.permute.xlu0 0
      %1238 = vperm.xlu0 %1237, %v1119
      %v1239 = vpop.permute.xlu0 %1238
      %1242 = vset.pattern.permute.xlu0 0
      %1243 = vperm.xlu0 %1242, %v1120
      %v1244 = vpop.permute.xlu0 %1243
      %v1246 = vadd.f32 %v1228, %v1239
      %v1247 = vadd.f32 %v1229, %v1239
      %v1248 = vadd.f32 %v1230, %v1239
      %v1249 = vadd.f32 %v1231, %v1239
      %v1250 = vadd.f32 %v1232, %v1244
      %v1251 = vadd.f32 %v1233, %v1244
      %v1252 = vadd.f32 %v1234, %v1244
      %v1253 = vadd.f32 %v1235, %v1244
      %v1254 = vld [vmem:[%s6] sm:$0xff]
      %v1255 = vld [vmem:[%s6 + $0x8] sm:$0xff]
      %v1256 = vld [vmem:[%s6 + $0x10] sm:$0xff]
      %v1257 = vld [vmem:[%s6 + $0x18] sm:$0xff]
      %v1258 = vld [vmem:[%s6 + $0x20] sm:$0xff]
      %v1259 = vld [vmem:[%s6 + $0x28] sm:$0xff]
      %v1260 = vld [vmem:[%s6 + $0x30] sm:$0xff]
      %v1261 = vld [vmem:[%s6 + $0x38] sm:$0xff]
      %v1262 = vld [vmem:[%s7] sm:$0xff]
      %v1263 = vld [vmem:[%s7 + $0x8] sm:$0xff]
      %v1264 = vld [vmem:[%s7 + $0x10] sm:$0xff]
      %v1265 = vld [vmem:[%s7 + $0x18] sm:$0xff]
      %v1266 = vld [vmem:[%s7 + $0x20] sm:$0xff]
      %v1267 = vld [vmem:[%s7 + $0x28] sm:$0xff]
      %v1268 = vld [vmem:[%s7 + $0x30] sm:$0xff]
      %v1269 = vld [vmem:[%s7 + $0x38] sm:$0xff]
      %1271 = vset.pattern.permute.xlu0 0
      %1272 = vperm.xlu0 %1271, %v1262
      %v1273 = vpop.permute.xlu0 %1272
      %1276 = vset.pattern.permute.xlu0 0
      %1277 = vperm.xlu0 %1276, %v1263
      %v1278 = vpop.permute.xlu0 %1277
      %1281 = vset.pattern.permute.xlu0 0
      %1282 = vperm.xlu0 %1281, %v1264
      %v1283 = vpop.permute.xlu0 %1282
      %1286 = vset.pattern.permute.xlu0 0
      %1287 = vperm.xlu0 %1286, %v1265
      %v1288 = vpop.permute.xlu0 %1287
      %1291 = vset.pattern.permute.xlu0 0
      %1292 = vperm.xlu0 %1291, %v1266
      %v1293 = vpop.permute.xlu0 %1292
      %1296 = vset.pattern.permute.xlu0 0
      %1297 = vperm.xlu0 %1296, %v1267
      %v1298 = vpop.permute.xlu0 %1297
      %1301 = vset.pattern.permute.xlu0 0
      %1302 = vperm.xlu0 %1301, %v1268
      %v1303 = vpop.permute.xlu0 %1302
      %1306 = vset.pattern.permute.xlu0 0
      %1307 = vperm.xlu0 %1306, %v1269
      %v1308 = vpop.permute.xlu0 %1307
      %vm1310 = vcmask 130048
      %v1312 = vsel %vm1310, %v1254, 0
      %v1315 = vsel %vm1310, %v1255, 0
      %v1318 = vsel %vm1310, %v1256, 0
      %v1321 = vsel %vm1310, %v1257, 0
      %v1324 = vsel %vm1310, %v1258, 0
      %v1327 = vsel %vm1310, %v1259, 0
      %v1330 = vsel %vm1310, %v1260, 0
      %v1333 = vsel %vm1310, %v1261, 0
      %1335 = vmatprep.subr.mxu0 %v1247
      %1336 = vmatpush1.msra.mxu0 %v1246
      %1337 = vmatprep.subr.mxu0 %v1251
      %1338 = vmatpush1.msra.mxu0 %v1250
      %1339 = vmatprep.subr.mxu0 0.0
      %1340 = vmatpush1.msra.mxu0 0.0
      %1341 = vmatprep.subr.mxu0 0.0
      %1342 = vmatpush1.msra.mxu0 0.0
      %1343 = vmatprep.subr.mxu0 0.0
      %1344 = vmatpush1.msra.mxu0 0.0
      %1345 = vmatprep.subr.mxu0 0.0
      %1346 = vmatpush1.msra.mxu0 0.0
      %1347 = vmatprep.subr.mxu0 0.0
      %1348 = vmatpush1.msra.mxu0 0.0
      %1349 = vmatprep.subr.mxu0 0.0
      %1350 = vmatpush1.msra.mxu0 0.0
      %1351 = vmatprep.subr.mxu0 0.0
      %1352 = vmatpush1.msra.mxu0 0.0
      %1353 = vmatprep.subr.mxu0 0.0
      %1354 = vmatpush1.msra.mxu0 0.0
      %1355 = vmatprep.subr.mxu0 0.0
      %1356 = vmatpush1.msra.mxu0 0.0
      %1357 = vmatprep.subr.mxu0 0.0
      %1358 = vmatpush1.msra.mxu0 0.0
      %1359 = vmatprep.subr.mxu0 0.0
      %1360 = vmatpush1.msra.mxu0 0.0
      %1361 = vmatprep.subr.mxu0 0.0
      %1362 = vmatpush1.msra.mxu0 0.0
      %1363 = vmatprep.subr.mxu0 0.0
      %1364 = vmatpush1.msra.mxu0 0.0
      %1365 = vmatprep.subr.mxu0 0.0
      %1366 = vmatpush1.msra.mxu0 0.0
      %1367 = vmatprep.subr.mxu0 0.0
      %1368 = vmatpush1.msra.mxu0 0.0
      %1369 = vmatprep.subr.mxu0 0.0
      %1370 = vmatpush1.msra.mxu0 0.0
      %1371 = vmatprep.subr.mxu0 0.0
      %1372 = vmatpush1.msra.mxu0 0.0
      %1373 = vmatprep.subr.mxu0 0.0
      %1374 = vmatpush1.msra.mxu0 0.0
      %1375 = vmatprep.subr.mxu0 0.0
      %1376 = vmatpush1.msra.mxu0 0.0
      %1377 = vmatprep.subr.mxu0 0.0
      %1378 = vmatpush1.msra.mxu0 0.0
      %1379 = vmatprep.subr.mxu0 0.0
      %1380 = vmatpush1.msra.mxu0 0.0
      %1381 = vmatprep.subr.mxu0 0.0
      %1382 = vmatpush1.msra.mxu0 0.0
      %1383 = vmatprep.subr.mxu0 0.0
      %1384 = vmatpush1.msra.mxu0 0.0
      %1385 = vmatprep.subr.mxu0 0.0
      %1386 = vmatpush1.msra.mxu0 0.0
      %1387 = vmatprep.subr.mxu0 0.0
      %1388 = vmatpush1.msra.mxu0 0.0
      %1389 = vmatprep.subr.mxu0 0.0
      %1390 = vmatpush1.msra.mxu0 0.0
      %1391 = vmatprep.subr.mxu0 0.0
      %1392 = vmatpush1.msra.mxu0 0.0
      %1393 = vmatprep.subr.mxu0 0.0
      %1394 = vmatpush1.msra.mxu0 0.0
      %1395 = vmatprep.subr.mxu0 0.0
      %1396 = vmatpush1.msra.mxu0 0.0
      %1397 = vmatprep.subr.mxu0 0.0
      %1398 = vmatpush1.msra.mxu0 0.0
      %1399 = vmatprep.mubr.f32.mxu0 0.0
      %1400 = vmatmul.mubr.f32.gmra.mrb[0].mxu0 %v1312
      %v1401 = vpop.f32.mrb[0].mxu0
      %v1402 = vadd.f32 %v1273, %v1401
      %v1403 = vpop.f32.mrb[0].mxu0
      %v1404 = vadd.f32 %v1273, %v1403
      %1405 = vmatprep.mubr.f32.mxu0 0.0
      %1406 = vmatmul.mubr.f32.gmra.mrb[0].mxu0 %v1315
      %v1407 = vpop.f32.mrb[0].mxu0
      %v1408 = vadd.f32 %v1278, %v1407
      %v1409 = vpop.f32.mrb[0].mxu0
      %v1410 = vadd.f32 %v1278, %v1409
      %1411 = vmatprep.mubr.f32.mxu0 0.0
      %1412 = vmatmul.mubr.f32.gmra.mrb[0].mxu0 %v1318
      %v1413 = vpop.f32.mrb[0].mxu0
      %v1414 = vadd.f32 %v1283, %v1413
      %v1415 = vpop.f32.mrb[0].mxu0
      %v1416 = vadd.f32 %v1283, %v1415
      %1417 = vmatprep.mubr.f32.mxu0 0.0
      %1418 = vmatmul.mubr.f32.gmra.mrb[0].mxu0 %v1321
      %v1419 = vpop.f32.mrb[0].mxu0
      %v1420 = vadd.f32 %v1288, %v1419
      %v1421 = vpop.f32.mrb[0].mxu0
      %v1422 = vadd.f32 %v1288, %v1421
      %1423 = vmatprep.mubr.f32.mxu0 0.0
      %1424 = vmatmul.mubr.f32.gmra.mrb[0].mxu0 %v1324
      %v1425 = vpop.f32.mrb[0].mxu0
      %v1426 = vadd.f32 %v1293, %v1425
      %v1427 = vpop.f32.mrb[0].mxu0
      %v1428 = vadd.f32 %v1293, %v1427
      %1429 = vmatprep.mubr.f32.mxu0 0.0
      %1430 = vmatmul.mubr.f32.gmra.mrb[0].mxu0 %v1327
      %v1431 = vpop.f32.mrb[0].mxu0
      %v1432 = vadd.f32 %v1298, %v1431
      %v1433 = vpop.f32.mrb[0].mxu0
      %v1434 = vadd.f32 %v1298, %v1433
      %1435 = vmatprep.mubr.f32.mxu0 0.0
      %1436 = vmatmul.mubr.f32.gmra.mrb[0].mxu0 %v1330
      %v1437 = vpop.f32.mrb[0].mxu0
      %v1438 = vadd.f32 %v1303, %v1437
      %v1439 = vpop.f32.mrb[0].mxu0
      %v1440 = vadd.f32 %v1303, %v1439
      %1441 = vmatprep.mubr.f32.mxu0 0.0
      %1442 = vmatmul.mubr.f32.gmra.mrb[0].mxu0 %v1333
      %v1443 = vpop.f32.mrb[0].mxu0
      %v1444 = vadd.f32 %v1308, %v1443
      %v1445 = vpop.f32.mrb[0].mxu0
      %v1446 = vadd.f32 %v1308, %v1445
      %1447 = vdwg.mxu0
      %1448 = vmatprep.subr.mxu0 %v1249
      %1449 = vmatpush1.msra.mxu0 %v1248
      %1450 = vmatprep.subr.mxu0 %v1253
      %1451 = vmatpush1.msra.mxu0 %v1252
      %1452 = vmatprep.subr.mxu0 0.0
      %1453 = vmatpush1.msra.mxu0 0.0
      %1454 = vmatprep.subr.mxu0 0.0
      %1455 = vmatpush1.msra.mxu0 0.0
      %1456 = vmatprep.subr.mxu0 0.0
      %1457 = vmatpush1.msra.mxu0 0.0
      %1458 = vmatprep.subr.mxu0 0.0
      %1459 = vmatpush1.msra.mxu0 0.0
      %1460 = vmatprep.subr.mxu0 0.0
      %1461 = vmatpush1.msra.mxu0 0.0
      %1462 = vmatprep.subr.mxu0 0.0
      %1463 = vmatpush1.msra.mxu0 0.0
      %1464 = vmatprep.subr.mxu0 0.0
      %1465 = vmatpush1.msra.mxu0 0.0
      %1466 = vmatprep.subr.mxu0 0.0
      %1467 = vmatpush1.msra.mxu0 0.0
      %1468 = vmatprep.subr.mxu0 0.0
      %1469 = vmatpush1.msra.mxu0 0.0
      %1470 = vmatprep.subr.mxu0 0.0
      %1471 = vmatpush1.msra.mxu0 0.0
      %1472 = vmatprep.subr.mxu0 0.0
      %1473 = vmatpush1.msra.mxu0 0.0
      %1474 = vmatprep.subr.mxu0 0.0
      %1475 = vmatpush1.msra.mxu0 0.0
      %1476 = vmatprep.subr.mxu0 0.0
      %1477 = vmatpush1.msra.mxu0 0.0
      %1478 = vmatprep.subr.mxu0 0.0
      %1479 = vmatpush1.msra.mxu0 0.0
      %1480 = vmatprep.subr.mxu0 0.0
      %1481 = vmatpush1.msra.mxu0 0.0
      %1482 = vmatprep.subr.mxu0 0.0
      %1483 = vmatpush1.msra.mxu0 0.0
      %1484 = vmatprep.subr.mxu0 0.0
      %1485 = vmatpush1.msra.mxu0 0.0
      %1486 = vmatprep.subr.mxu0 0.0
      %1487 = vmatpush1.msra.mxu0 0.0
      %1488 = vmatprep.subr.mxu0 0.0
      %1489 = vmatpush1.msra.mxu0 0.0
      %1490 = vmatprep.subr.mxu0 0.0
      %1491 = vmatpush1.msra.mxu0 0.0
      %1492 = vmatprep.subr.mxu0 0.0
      %1493 = vmatpush1.msra.mxu0 0.0
      %1494 = vmatprep.subr.mxu0 0.0
      %1495 = vmatpush1.msra.mxu0 0.0
      %1496 = vmatprep.subr.mxu0 0.0
      %1497 = vmatpush1.msra.mxu0 0.0
      %1498 = vmatprep.subr.mxu0 0.0
      %1499 = vmatpush1.msra.mxu0 0.0
      %1500 = vmatprep.subr.mxu0 0.0
      %1501 = vmatpush1.msra.mxu0 0.0
      %1502 = vmatprep.subr.mxu0 0.0
      %1503 = vmatpush1.msra.mxu0 0.0
      %1504 = vmatprep.subr.mxu0 0.0
      %1505 = vmatpush1.msra.mxu0 0.0
      %1506 = vmatprep.subr.mxu0 0.0
      %1507 = vmatpush1.msra.mxu0 0.0
      %1508 = vmatprep.subr.mxu0 0.0
      %1509 = vmatpush1.msra.mxu0 0.0
      %1510 = vmatprep.subr.mxu0 0.0
      %1511 = vmatpush1.msra.mxu0 0.0
      %1512 = vmatprep.mubr.f32.mxu0 0.0
      %1513 = vmatmul.mubr.f32.gmra.mrb[0].mxu0 %v1312
      %v1514 = vpop.f32.mrb[0].mxu0
      %v1515 = vadd.f32 %v1273, %v1514
      %v1516 = vpop.f32.mrb[0].mxu0
      %v1517 = vadd.f32 %v1273, %v1516
      %1518 = vmatprep.mubr.f32.mxu0 0.0
      %1519 = vmatmul.mubr.f32.gmra.mrb[0].mxu0 %v1315
      %v1520 = vpop.f32.mrb[0].mxu0
      %v1521 = vadd.f32 %v1278, %v1520
      %v1522 = vpop.f32.mrb[0].mxu0
      %v1523 = vadd.f32 %v1278, %v1522
      %1524 = vmatprep.mubr.f32.mxu0 0.0
      %1525 = vmatmul.mubr.f32.gmra.mrb[0].mxu0 %v1318
      %v1526 = vpop.f32.mrb[0].mxu0
      %v1527 = vadd.f32 %v1283, %v1526
      %v1528 = vpop.f32.mrb[0].mxu0
      %v1529 = vadd.f32 %v1283, %v1528
      %1530 = vmatprep.mubr.f32.mxu0 0.0
      %1531 = vmatmul.mubr.f32.gmra.mrb[0].mxu0 %v1321
      %v1532 = vpop.f32.mrb[0].mxu0
      %v1533 = vadd.f32 %v1288, %v1532
      %v1534 = vpop.f32.mrb[0].mxu0
      %v1535 = vadd.f32 %v1288, %v1534
      %1536 = vmatprep.mubr.f32.mxu0 0.0
      %1537 = vmatmul.mubr.f32.gmra.mrb[0].mxu0 %v1324
      %v1538 = vpop.f32.mrb[0].mxu0
      %v1539 = vadd.f32 %v1293, %v1538
      %v1540 = vpop.f32.mrb[0].mxu0
      %v1541 = vadd.f32 %v1293, %v1540
      %1542 = vmatprep.mubr.f32.mxu0 0.0
      %1543 = vmatmul.mubr.f32.gmra.mrb[0].mxu0 %v1327
      %v1544 = vpop.f32.mrb[0].mxu0
      %v1545 = vadd.f32 %v1298, %v1544
      %v1546 = vpop.f32.mrb[0].mxu0
      %v1547 = vadd.f32 %v1298, %v1546
      %1548 = vmatprep.mubr.f32.mxu0 0.0
      %1549 = vmatmul.mubr.f32.gmra.mrb[0].mxu0 %v1330
      %v1550 = vpop.f32.mrb[0].mxu0
      %v1551 = vadd.f32 %v1303, %v1550
      %v1552 = vpop.f32.mrb[0].mxu0
      %v1553 = vadd.f32 %v1303, %v1552
      %1554 = vmatprep.mubr.f32.mxu0 0.0
      %1555 = vmatmul.mubr.f32.gmra.mrb[0].mxu0 %v1333
      %v1556 = vpop.f32.mrb[0].mxu0
      %v1557 = vadd.f32 %v1308, %v1556
      %v1558 = vpop.f32.mrb[0].mxu0
      %v1559 = vadd.f32 %v1308, %v1558
      %1560 = vdwg.mxu0
      %v1561 = vmul.f32 %v1402, 0.5
      %v1562 = vmul.f32 %v1404, 0.5
      %v1563 = vmul.f32 %v1515, 0.5
      %v1564 = vmul.f32 %v1517, 0.5
      %v1565 = vmul.f32 %v1408, 0.5
      %v1566 = vmul.f32 %v1410, 0.5
      %v1567 = vmul.f32 %v1521, 0.5
      %v1568 = vmul.f32 %v1523, 0.5
      %v1569 = vmul.f32 %v1414, 0.5
      %v1570 = vmul.f32 %v1416, 0.5
      %v1571 = vmul.f32 %v1527, 0.5
      %v1572 = vmul.f32 %v1529, 0.5
      %v1573 = vmul.f32 %v1420, 0.5
      %v1574 = vmul.f32 %v1422, 0.5
      %v1575 = vmul.f32 %v1533, 0.5
      %v1576 = vmul.f32 %v1535, 0.5
      %v1577 = vmul.f32 %v1426, 0.5
      %v1578 = vmul.f32 %v1428, 0.5
      %v1579 = vmul.f32 %v1539, 0.5
      %v1580 = vmul.f32 %v1541, 0.5
      %v1581 = vmul.f32 %v1432, 0.5
      %v1582 = vmul.f32 %v1434, 0.5
      %v1583 = vmul.f32 %v1545, 0.5
      %v1584 = vmul.f32 %v1547, 0.5
      %v1585 = vmul.f32 %v1438, 0.5
      %v1586 = vmul.f32 %v1440, 0.5
      %v1587 = vmul.f32 %v1551, 0.5
      %v1588 = vmul.f32 %v1553, 0.5
      %v1589 = vmul.f32 %v1444, 0.5
      %v1590 = vmul.f32 %v1446, 0.5
      %v1591 = vmul.f32 %v1557, 0.5
      %v1592 = vmul.f32 %v1559, 0.5
      %v1593 = vmul.f32 %v1402, 0.70710677
      %v1594 = vmul.f32 %v1404, 0.70710677
      %v1595 = vmul.f32 %v1515, 0.70710677
      %v1596 = vmul.f32 %v1517, 0.70710677
      %v1597 = vmul.f32 %v1408, 0.70710677
      %v1598 = vmul.f32 %v1410, 0.70710677
      %v1599 = vmul.f32 %v1521, 0.70710677
      %v1600 = vmul.f32 %v1523, 0.70710677
      %v1601 = vmul.f32 %v1414, 0.70710677
      %v1602 = vmul.f32 %v1416, 0.70710677
      %v1603 = vmul.f32 %v1527, 0.70710677
      %v1604 = vmul.f32 %v1529, 0.70710677
      %v1605 = vmul.f32 %v1420, 0.70710677
      %v1606 = vmul.f32 %v1422, 0.70710677
      %v1607 = vmul.f32 %v1533, 0.70710677
      %v1608 = vmul.f32 %v1535, 0.70710677
      %v1609 = vmul.f32 %v1426, 0.70710677
      %v1610 = vmul.f32 %v1428, 0.70710677
      %v1611 = vmul.f32 %v1539, 0.70710677
      %v1612 = vmul.f32 %v1541, 0.70710677
      %v1613 = vmul.f32 %v1432, 0.70710677
      %v1614 = vmul.f32 %v1434, 0.70710677
      %v1615 = vmul.f32 %v1545, 0.70710677
      %v1616 = vmul.f32 %v1547, 0.70710677
      %v1617 = vmul.f32 %v1438, 0.70710677
      %v1618 = vmul.f32 %v1440, 0.70710677
      %v1619 = vmul.f32 %v1551, 0.70710677
      %v1620 = vmul.f32 %v1553, 0.70710677
      %v1621 = vmul.f32 %v1444, 0.70710677
      %v1622 = vmul.f32 %v1446, 0.70710677
      %v1623 = vmul.f32 %v1557, 0.70710677
      %v1624 = vmul.f32 %v1559, 0.70710677
      %v1625 = verf.f32.pop %v1593
      %v1626 = verf.f32.pop %v1594
      %v1627 = verf.f32.pop %v1595
      %v1628 = verf.f32.pop %v1596
      %v1629 = verf.f32.pop %v1597
      %v1630 = verf.f32.pop %v1598
      %v1631 = verf.f32.pop %v1599
      %v1632 = verf.f32.pop %v1600
      %v1633 = verf.f32.pop %v1601
      %v1634 = verf.f32.pop %v1602
      %v1635 = verf.f32.pop %v1603
      %v1636 = verf.f32.pop %v1604
      %v1637 = verf.f32.pop %v1605
      %v1638 = verf.f32.pop %v1606
      %v1639 = verf.f32.pop %v1607
      %v1640 = verf.f32.pop %v1608
      %v1641 = verf.f32.pop %v1609
      %v1642 = verf.f32.pop %v1610
      %v1643 = verf.f32.pop %v1611
      %v1644 = verf.f32.pop %v1612
      %v1645 = verf.f32.pop %v1613
      %v1646 = verf.f32.pop %v1614
      %v1647 = verf.f32.pop %v1615
      %v1648 = verf.f32.pop %v1616
      %v1649 = verf.f32.pop %v1617
      %v1650 = verf.f32.pop %v1618
      %v1651 = verf.f32.pop %v1619
      %v1652 = verf.f32.pop %v1620
      %v1653 = verf.f32.pop %v1621
      %v1654 = verf.f32.pop %v1622
      %v1655 = verf.f32.pop %v1623
      %v1656 = verf.f32.pop %v1624
      %v1657 = vadd.f32 %v1625, 1.0
      %v1658 = vadd.f32 %v1626, 1.0
      %v1659 = vadd.f32 %v1627, 1.0
      %v1660 = vadd.f32 %v1628, 1.0
      %v1661 = vadd.f32 %v1629, 1.0
      %v1662 = vadd.f32 %v1630, 1.0
      %v1663 = vadd.f32 %v1631, 1.0
      %v1664 = vadd.f32 %v1632, 1.0
      %v1665 = vadd.f32 %v1633, 1.0
      %v1666 = vadd.f32 %v1634, 1.0
      %v1667 = vadd.f32 %v1635, 1.0
      %v1668 = vadd.f32 %v1636, 1.0
      %v1669 = vadd.f32 %v1637, 1.0
      %v1670 = vadd.f32 %v1638, 1.0
      %v1671 = vadd.f32 %v1639, 1.0
      %v1672 = vadd.f32 %v1640, 1.0
      %v1673 = vadd.f32 %v1641, 1.0
      %v1674 = vadd.f32 %v1642, 1.0
      %v1675 = vadd.f32 %v1643, 1.0
      %v1676 = vadd.f32 %v1644, 1.0
      %v1677 = vadd.f32 %v1645, 1.0
      %v1678 = vadd.f32 %v1646, 1.0
      %v1679 = vadd.f32 %v1647, 1.0
      %v1680 = vadd.f32 %v1648, 1.0
      %v1681 = vadd.f32 %v1649, 1.0
      %v1682 = vadd.f32 %v1650, 1.0
      %v1683 = vadd.f32 %v1651, 1.0
      %v1684 = vadd.f32 %v1652, 1.0
      %v1685 = vadd.f32 %v1653, 1.0
      %v1686 = vadd.f32 %v1654, 1.0
      %v1687 = vadd.f32 %v1655, 1.0
      %v1688 = vadd.f32 %v1656, 1.0
      %v1689 = vmul.f32 %v1561, %v1657
      %v1690 = vmul.f32 %v1562, %v1658
      %v1691 = vmul.f32 %v1563, %v1659
      %v1692 = vmul.f32 %v1564, %v1660
      %v1693 = vmul.f32 %v1565, %v1661
      %v1694 = vmul.f32 %v1566, %v1662
      %v1695 = vmul.f32 %v1567, %v1663
      %v1696 = vmul.f32 %v1568, %v1664
      %v1697 = vmul.f32 %v1569, %v1665
      %v1698 = vmul.f32 %v1570, %v1666
      %v1699 = vmul.f32 %v1571, %v1667
      %v1700 = vmul.f32 %v1572, %v1668
      %v1701 = vmul.f32 %v1573, %v1669
      %v1702 = vmul.f32 %v1574, %v1670
      %v1703 = vmul.f32 %v1575, %v1671
      %v1704 = vmul.f32 %v1576, %v1672
      %v1705 = vmul.f32 %v1577, %v1673
      %v1706 = vmul.f32 %v1578, %v1674
      %v1707 = vmul.f32 %v1579, %v1675
      %v1708 = vmul.f32 %v1580, %v1676
      %v1709 = vmul.f32 %v1581, %v1677
      %v1710 = vmul.f32 %v1582, %v1678
      %v1711 = vmul.f32 %v1583, %v1679
      %v1712 = vmul.f32 %v1584, %v1680
      %v1713 = vmul.f32 %v1585, %v1681
      %v1714 = vmul.f32 %v1586, %v1682
      %v1715 = vmul.f32 %v1587, %v1683
      %v1716 = vmul.f32 %v1588, %v1684
      %v1717 = vmul.f32 %v1589, %v1685
      %v1718 = vmul.f32 %v1590, %v1686
      %v1719 = vmul.f32 %v1591, %v1687
      %v1720 = vmul.f32 %v1592, %v1688
      %v1721 = vld [vmem:[%s8] sm:$0xff]
      %v1722 = vld [vmem:[%s8 + $0x8] sm:$0xff]
      %v1723 = vld [vmem:[%s9] sm:$0xff]
      %v1724 = vld [vmem:[%s9 + $0x8] sm:$0xff]
      %1726 = vset.pattern.permute.xlu0 0
      %1727 = vperm.xlu0 %1726, %v1723
      %v1728 = vpop.permute.xlu0 %1727
      %1731 = vset.pattern.permute.xlu0 0
      %1732 = vperm.xlu0 %1731, %v1724
      %v1733 = vpop.permute.xlu0 %1732
      %vm1735 = vcmask 523264
      %v1737 = vsel %vm1735, %v1721, 0
      %v1740 = vsel %vm1735, %v1722, 0
      %1742 = vmatprep.subr.mxu0 %v1690
      %1743 = vmatpush1.msra.mxu0 %v1689
      %1744 = vmatprep.subr.mxu0 %v1694
      %1745 = vmatpush1.msra.mxu0 %v1693
      %1746 = vmatprep.subr.mxu0 %v1698
      %1747 = vmatpush1.msra.mxu0 %v1697
      %1748 = vmatprep.subr.mxu0 %v1702
      %1749 = vmatpush1.msra.mxu0 %v1701
      %1750 = vmatprep.subr.mxu0 %v1706
      %1751 = vmatpush1.msra.mxu0 %v1705
      %1752 = vmatprep.subr.mxu0 %v1710
      %1753 = vmatpush1.msra.mxu0 %v1709
      %1754 = vmatprep.subr.mxu0 %v1714
      %1755 = vmatpush1.msra.mxu0 %v1713
      %1756 = vmatprep.subr.mxu0 %v1718
      %1757 = vmatpush1.msra.mxu0 %v1717
      %1758 = vmatprep.subr.mxu0 0.0
      %1759 = vmatpush1.msra.mxu0 0.0
      %1760 = vmatprep.subr.mxu0 0.0
      %1761 = vmatpush1.msra.mxu0 0.0
      %1762 = vmatprep.subr.mxu0 0.0
      %1763 = vmatpush1.msra.mxu0 0.0
      %1764 = vmatprep.subr.mxu0 0.0
      %1765 = vmatpush1.msra.mxu0 0.0
      %1766 = vmatprep.subr.mxu0 0.0
      %1767 = vmatpush1.msra.mxu0 0.0
      %1768 = vmatprep.subr.mxu0 0.0
      %1769 = vmatpush1.msra.mxu0 0.0
      %1770 = vmatprep.subr.mxu0 0.0
      %1771 = vmatpush1.msra.mxu0 0.0
      %1772 = vmatprep.subr.mxu0 0.0
      %1773 = vmatpush1.msra.mxu0 0.0
      %1774 = vmatprep.subr.mxu0 0.0
      %1775 = vmatpush1.msra.mxu0 0.0
      %1776 = vmatprep.subr.mxu0 0.0
      %1777 = vmatpush1.msra.mxu0 0.0
      %1778 = vmatprep.subr.mxu0 0.0
      %1779 = vmatpush1.msra.mxu0 0.0
      %1780 = vmatprep.subr.mxu0 0.0
      %1781 = vmatpush1.msra.mxu0 0.0
      %1782 = vmatprep.subr.mxu0 0.0
      %1783 = vmatpush1.msra.mxu0 0.0
      %1784 = vmatprep.subr.mxu0 0.0
      %1785 = vmatpush1.msra.mxu0 0.0
      %1786 = vmatprep.subr.mxu0 0.0
      %1787 = vmatpush1.msra.mxu0 0.0
      %1788 = vmatprep.subr.mxu0 0.0
      %1789 = vmatpush1.msra.mxu0 0.0
      %1790 = vmatprep.subr.mxu0 0.0
      %1791 = vmatpush1.msra.mxu0 0.0
      %1792 = vmatprep.subr.mxu0 0.0
      %1793 = vmatpush1.msra.mxu0 0.0
      %1794 = vmatprep.subr.mxu0 0.0
      %1795 = vmatpush1.msra.mxu0 0.0
      %1796 = vmatprep.subr.mxu0 0.0
      %1797 = vmatpush1.msra.mxu0 0.0
      %1798 = vmatprep.subr.mxu0 0.0
      %1799 = vmatpush1.msra.mxu0 0.0
      %1800 = vmatprep.subr.mxu0 0.0
      %1801 = vmatpush1.msra.mxu0 0.0
      %1802 = vmatprep.subr.mxu0 0.0
      %1803 = vmatpush1.msra.mxu0 0.0
      %1804 = vmatprep.subr.mxu0 0.0
      %1805 = vmatpush1.msra.mxu0 0.0
      %1806 = vmatprep.mubr.f32.mxu0 0.0
      %1807 = vmatmul.mubr.f32.gmra.mrb[0].mxu0 %v1737
      %v1808 = vpop.f32.mrb[0].mxu0
      %v1809 = vadd.f32 %v1728, %v1808
      %v1810 = vpop.f32.mrb[0].mxu0
      %v1811 = vadd.f32 %v1728, %v1810
      %1812 = vmatprep.mubr.f32.mxu0 0.0
      %1813 = vmatmul.mubr.f32.gmra.mrb[0].mxu0 %v1740
      %v1814 = vpop.f32.mrb[0].mxu0
      %v1815 = vadd.f32 %v1733, %v1814
      %v1816 = vpop.f32.mrb[0].mxu0
      %v1817 = vadd.f32 %v1733, %v1816
      %1818 = vdwg.mxu0
      %1819 = vmatprep.subr.mxu0 %v1692
      %1820 = vmatpush1.msra.mxu0 %v1691
      %1821 = vmatprep.subr.mxu0 %v1696
      %1822 = vmatpush1.msra.mxu0 %v1695
      %1823 = vmatprep.subr.mxu0 %v1700
      %1824 = vmatpush1.msra.mxu0 %v1699
      %1825 = vmatprep.subr.mxu0 %v1704
      %1826 = vmatpush1.msra.mxu0 %v1703
      %1827 = vmatprep.subr.mxu0 %v1708
      %1828 = vmatpush1.msra.mxu0 %v1707
      %1829 = vmatprep.subr.mxu0 %v1712
      %1830 = vmatpush1.msra.mxu0 %v1711
      %1831 = vmatprep.subr.mxu0 %v1716
      %1832 = vmatpush1.msra.mxu0 %v1715
      %1833 = vmatprep.subr.mxu0 %v1720
      %1834 = vmatpush1.msra.mxu0 %v1719
      %1835 = vmatprep.subr.mxu0 0.0
      %1836 = vmatpush1.msra.mxu0 0.0
      %1837 = vmatprep.subr.mxu0 0.0
      %1838 = vmatpush1.msra.mxu0 0.0
      %1839 = vmatprep.subr.mxu0 0.0
      %1840 = vmatpush1.msra.mxu0 0.0
      %1841 = vmatprep.subr.mxu0 0.0
      %1842 = vmatpush1.msra.mxu0 0.0
      %1843 = vmatprep.subr.mxu0 0.0
      %1844 = vmatpush1.msra.mxu0 0.0
      %1845 = vmatprep.subr.mxu0 0.0
      %1846 = vmatpush1.msra.mxu0 0.0
      %1847 = vmatprep.subr.mxu0 0.0
      %1848 = vmatpush1.msra.mxu0 0.0
      %1849 = vmatprep.subr.mxu0 0.0
      %1850 = vmatpush1.msra.mxu0 0.0
      %1851 = vmatprep.subr.mxu0 0.0
      %1852 = vmatpush1.msra.mxu0 0.0
      %1853 = vmatprep.subr.mxu0 0.0
      %1854 = vmatpush1.msra.mxu0 0.0
      %1855 = vmatprep.subr.mxu0 0.0
      %1856 = vmatpush1.msra.mxu0 0.0
      %1857 = vmatprep.subr.mxu0 0.0
      %1858 = vmatpush1.msra.mxu0 0.0
      %1859 = vmatprep.subr.mxu0 0.0
      %1860 = vmatpush1.msra.mxu0 0.0
      %1861 = vmatprep.subr.mxu0 0.0
      %1862 = vmatpush1.msra.mxu0 0.0
      %1863 = vmatprep.subr.mxu0 0.0
      %1864 = vmatpush1.msra.mxu0 0.0
      %1865 = vmatprep.subr.mxu0 0.0
      %1866 = vmatpush1.msra.mxu0 0.0
      %1867 = vmatprep.subr.mxu0 0.0
      %1868 = vmatpush1.msra.mxu0 0.0
      %1869 = vmatprep.subr.mxu0 0.0
      %1870 = vmatpush1.msra.mxu0 0.0
      %1871 = vmatprep.subr.mxu0 0.0
      %1872 = vmatpush1.msra.mxu0 0.0
      %1873 = vmatprep.subr.mxu0 0.0
      %1874 = vmatpush1.msra.mxu0 0.0
      %1875 = vmatprep.subr.mxu0 0.0
      %1876 = vmatpush1.msra.mxu0 0.0
      %1877 = vmatprep.subr.mxu0 0.0
      %1878 = vmatpush1.msra.mxu0 0.0
      %1879 = vmatprep.subr.mxu0 0.0
      %1880 = vmatpush1.msra.mxu0 0.0
      %1881 = vmatprep.subr.mxu0 0.0
      %1882 = vmatpush1.msra.mxu0 0.0
      %1883 = vmatprep.mubr.f32.mxu0 0.0
      %1884 = vmatmul.mubr.f32.gmra.mrb[0].mxu0 %v1737
      %v1885 = vpop.f32.mrb[0].mxu0
      %v1886 = vadd.f32 %v1728, %v1885
      %v1887 = vpop.f32.mrb[0].mxu0
      %v1888 = vadd.f32 %v1728, %v1887
      %1889 = vmatprep.mubr.f32.mxu0 0.0
      %1890 = vmatmul.mubr.f32.gmra.mrb[0].mxu0 %v1740
      %v1891 = vpop.f32.mrb[0].mxu0
      %v1892 = vadd.f32 %v1733, %v1891
      %v1893 = vpop.f32.mrb[0].mxu0
      %v1894 = vadd.f32 %v1733, %v1893
      %1895 = vdwg.mxu0
      %v1896 = vld [vmem:[%s12] sm:$0xff]
      %v1897 = vld [vmem:[%s12 + $0x8] sm:$0xff]
      %1899 = vset.pattern.permute.xlu0 0
      %1900 = vperm.xlu0 %1899, %v1896
      %v1901 = vpop.permute.xlu0 %1900
      %1904 = vset.pattern.permute.xlu0 0
      %1905 = vperm.xlu0 %1904, %v1897
      %v1906 = vpop.permute.xlu0 %1905
      %v1908 = vmul.f32 %v1809, %v1901
      %v1909 = vmul.f32 %v1811, %v1901
      %v1910 = vmul.f32 %v1886, %v1901
      %v1911 = vmul.f32 %v1888, %v1901
      %v1912 = vmul.f32 %v1815, %v1906
      %v1913 = vmul.f32 %v1817, %v1906
      %v1914 = vmul.f32 %v1892, %v1906
      %v1915 = vmul.f32 %v1894, %v1906
      %v1916 = vadd.f32 %v1908, %v1912
      %v1917 = vrot.slane %v1916, 4
      %v1918 = vadd.f32 %v1916, %v1917
      %v1919 = vrot.slane %v1918, 2
      %v1920 = vadd.f32 %v1918, %v1919
      %v1921 = vrot.slane %v1920, 1
      %v1922 = vadd.f32 %v1920, %v1921
      %v1923 = vadd.f32 %v1909, %v1913
      %v1924 = vrot.slane %v1923, 4
      %v1925 = vadd.f32 %v1923, %v1924
      %v1926 = vrot.slane %v1925, 2
      %v1927 = vadd.f32 %v1925, %v1926
      %v1928 = vrot.slane %v1927, 1
      %v1929 = vadd.f32 %v1927, %v1928
      %v1930 = vadd.f32 %v1910, %v1914
      %v1931 = vrot.slane %v1930, 4
      %v1932 = vadd.f32 %v1930, %v1931
      %v1933 = vrot.slane %v1932, 2
      %v1934 = vadd.f32 %v1932, %v1933
      %v1935 = vrot.slane %v1934, 1
      %v1936 = vadd.f32 %v1934, %v1935
      %v1937 = vadd.f32 %v1911, %v1915
      %v1938 = vrot.slane %v1937, 4
      %v1939 = vadd.f32 %v1937, %v1938
      %v1940 = vrot.slane %v1939, 2
      %v1941 = vadd.f32 %v1939, %v1940
      %v1942 = vrot.slane %v1941, 1
      %v1943 = vadd.f32 %v1941, %v1942
      %v1944 = vld [vmem:[#allocation2] sm:$0x1]
      %1946 = vset.pattern.permute.xlu0 0
      %1947 = vperm.xlu0 %1946, %v1944
      %v1948 = vpop.permute.xlu0 %1947
      %v1950 = vlaneseq
      %v1951 = vshrl.u32 %v1950, 7
      %v1952 = vsub.s32 0, %v1951
      %v1953 = vrot.slane %v1948, %v1952
      %v1954 = vadd.f32 %v1922, %v1953
      %v1955 = vadd.f32 %v1929, %v1953
      %v1956 = vadd.f32 %v1936, %v1953
      %v1957 = vadd.f32 %v1943, %v1953
      %v1958 = vxor.u32 %v1954, 2147483648
      %v1959 = vxor.u32 %v1955, 2147483648
      %v1960 = vxor.u32 %v1956, 2147483648
      %v1961 = vxor.u32 %v1957, 2147483648
      %v1962 = vmul.f32 %v1958, 1.442695
      %v1963 = vpow.pop %v1962
      %v1964 = vmul.f32 %v1959, 1.442695
      %v1965 = vpow.pop %v1964
      %v1966 = vmul.f32 %v1960, 1.442695
      %v1967 = vpow.pop %v1966
      %v1968 = vmul.f32 %v1961, 1.442695
      %v1969 = vpow.pop %v1968
      %v1970 = vadd.f32 %v1963, 1.0
      %v1971 = vadd.f32 %v1965, 1.0
      %v1972 = vadd.f32 %v1967, 1.0
      %v1973 = vadd.f32 %v1969, 1.0
      %v1974 = vrcp.pop %v1970
      %v1975 = vmul.f32 1.0, %v1974
      %v1976 = vrcp.pop %v1971
      %v1977 = vmul.f32 1.0, %v1976
      %v1978 = vrcp.pop %v1972
      %v1979 = vmul.f32 1.0, %v1978
      %v1980 = vrcp.pop %v1973
      %v1981 = vmul.f32 1.0, %v1980
      %v1982 = vld [vmem:[%s10] sm:$0xff]
      %v1983 = vld [vmem:[%s10 + $0x8] sm:$0xff]
      %v1984 = vld [vmem:[%s11] sm:$0xff]
      %v1985 = vld [vmem:[%s11 + $0x8] sm:$0xff]
      %v1986 = vadd.f32 %v1809, %v1811
      %1987 = vadd.xlane.f32.xlu0 %v1986
      %v1988 = vpop.xlane.xlu0 %1987
      %v1989 = vadd.f32 %v1815, %v1817
      %1990 = vadd.xlane.f32.xlu0 %v1989
      %v1991 = vpop.xlane.xlu0 %1990
      %v1992 = vmul.f32 %v1988, 0.00390625
      %v1993 = vmul.f32 %v1991, 0.00390625
      %v1994 = vmul.f32 %v1982, %v1992
      %v1995 = vmul.f32 %v1983, %v1993
      %vm1996 = vcmask 31744
      %v1997 = vsel %vm1996, %v1994, 0.0
      %v1998 = vsel %vm1996, %v1995, 0.0
      %v1999 = vadd.f32 %v1997, %v1998
      %v2000 = vrot.slane %v1999, 4
      %v2001 = vadd.f32 %v1999, %v2000
      %v2002 = vrot.slane %v2001, 2
      %v2003 = vadd.f32 %v2001, %v2002
      %v2004 = vrot.slane %v2003, 1
      %v2005 = vadd.f32 %v2003, %v2004
      %v2006 = vmax.f32 %v2005, 0.0
      %v2007 = vmul.f32 %v1984, %v2006
      %v2008 = vmul.f32 %v1985, %v2006
      %v2009 = vsel %vm1996, %v2007, 0.0
      %2010 = vadd.xlane.f32.xlu0 %v2009
      %v2011 = vpop.xlane.xlu0 %2010
      %v2012 = vsel %vm1996, %v2008, 0.0
      %2013 = vadd.xlane.f32.xlu0 %v2012
      %v2014 = vpop.xlane.xlu0 %2013
      %v2015 = vxor.u32 %v2011, 2147483648
      %v2016 = vxor.u32 %v2014, 2147483648
      %v2017 = vmul.f32 %v2015, 1.442695
      %v2018 = vpow.pop %v2017
      %v2019 = vmul.f32 %v2016, 1.442695
      %v2020 = vpow.pop %v2019
      %v2021 = vadd.f32 %v2018, 1.0
      %v2022 = vadd.f32 %v2020, 1.0
      %v2023 = vrcp.pop %v2021
      %v2024 = vmul.f32 1.0, %v2023
      %v2025 = vrcp.pop %v2022
      %v2026 = vmul.f32 1.0, %v2025
      %v2027 = vadd.f32 %v2024, %v1975
      %v2028 = vadd.f32 %v2024, %v1977
      %v2029 = vadd.f32 %v2026, %v1975
      %v2030 = vadd.f32 %v2026, %v1977
      %v2031 = vmul.f32 %v1809, %v2027
      %v2032 = vmul.f32 %v1811, %v2028
      %v2033 = vmul.f32 %v1815, %v2029
      %v2034 = vmul.f32 %v1817, %v2030
      %v2035 = vadd.f32 %v2031, %v478
      %v2036 = vadd.f32 %v2032, %v479
      %v2037 = vadd.f32 %v2033, %v480
      %v2038 = vadd.f32 %v2034, %v481
      %2039 = vst [vmem:[%s476] sm:$0xff] %v2035
      %2040 = vst [vmem:[%s476 + $0x8] sm:$0xff] %v2036
      %2041 = vst [vmem:[%s476 + $0x10] sm:$0xff] %v2037
      %2042 = vst [vmem:[%s476 + $0x18] sm:$0xff] %v2038
      %v2043 = vadd.f32 %v1886, %v1888
      %2044 = vadd.xlane.f32.xlu0 %v2043
      %v2045 = vpop.xlane.xlu0 %2044
      %v2046 = vadd.f32 %v1892, %v1894
      %2047 = vadd.xlane.f32.xlu0 %v2046
      %v2048 = vpop.xlane.xlu0 %2047
      %v2049 = vmul.f32 %v2045, 0.00390625
      %v2050 = vmul.f32 %v2048, 0.00390625
      %v2051 = vmul.f32 %v1982, %v2049
      %v2052 = vmul.f32 %v1983, %v2050
      %v2053 = vsel %vm1996, %v2051, 0.0
      %v2054 = vsel %vm1996, %v2052, 0.0
      %v2055 = vadd.f32 %v2053, %v2054
      %v2056 = vrot.slane %v2055, 4
      %v2057 = vadd.f32 %v2055, %v2056
      %v2058 = vrot.slane %v2057, 2
      %v2059 = vadd.f32 %v2057, %v2058
      %v2060 = vrot.slane %v2059, 1
      %v2061 = vadd.f32 %v2059, %v2060
      %v2062 = vmax.f32 %v2061, 0.0
      %v2063 = vmul.f32 %v1984, %v2062
      %v2064 = vmul.f32 %v1985, %v2062
      %v2065 = vsel %vm1996, %v2063, 0.0
      %2066 = vadd.xlane.f32.xlu0 %v2065
      %v2067 = vpop.xlane.xlu0 %2066
      %v2068 = vsel %vm1996, %v2064, 0.0
      %2069 = vadd.xlane.f32.xlu0 %v2068
      %v2070 = vpop.xlane.xlu0 %2069
      %v2071 = vxor.u32 %v2067, 2147483648
      %v2072 = vxor.u32 %v2070, 2147483648
      %v2073 = vmul.f32 %v2071, 1.442695
      %v2074 = vpow.pop %v2073
      %v2075 = vmul.f32 %v2072, 1.442695
      %v2076 = vpow.pop %v2075
      %v2077 = vadd.f32 %v2074, 1.0
      %v2078 = vadd.f32 %v2076, 1.0
      %v2079 = vrcp.pop %v2077
      %v2080 = vmul.f32 1.0, %v2079
      %v2081 = vrcp.pop %v2078
      %v2082 = vmul.f32 1.0, %v2081
      %v2083 = vadd.f32 %v2080, %v1979
      %v2084 = vadd.f32 %v2080, %v1981
      %v2085 = vadd.f32 %v2082, %v1979
      %v2086 = vadd.f32 %v2082, %v1981
      %v2087 = vmul.f32 %v1886, %v2083
      %v2088 = vmul.f32 %v1888, %v2084
      %v2089 = vmul.f32 %v1892, %v2085
      %v2090 = vmul.f32 %v1894, %v2086
      %v2091 = vadd.f32 %v2087, %v483
      %v2092 = vadd.f32 %v2088, %v484
      %v2093 = vadd.f32 %v2089, %v485
      %v2094 = vadd.f32 %v2090, %v486
      %s2095 = scalar_lea.vmem %s476, 32
      %2096 = vst [vmem:[%s2095] sm:$0xff] %v2091
      %2097 = vst [vmem:[%s2095 + $0x8] sm:$0xff] %v2092
      %2098 = vst [vmem:[%s2095 + $0x10] sm:$0xff] %v2093
      %2099 = vst [vmem:[%s2095 + $0x18] sm:$0xff] %v2094
      %s2100 = smul.u32 2, %s27
      %p2101 = scmp.lt.s32.totalorder %s2100, 3
      %s2102 = scalar_select %p2101, %s2100, 3
      %s2103 = smul.addr %s2102, 4
      %s2104 = smul.addr %s2103, 8
      %s2105 = scalar_lea.vmem %s14, %s2104
      // Predicated region
      $region77: #{scse_block_forward.1} parent=75 // pred_check
        %p2106 = pneg %p344
      $region78: #{scse_block_forward.1} parent=75 // pred_check_branch
        %2108 = sbr.rel (%p2106) target = $region80
      $region79: #{scse_block_forward.1} parent=75 // pred_region
        %s2109 = smul.u32 2, %s27
      $region80: #{scse_block_forward.1} parent=75 // pred_fallthru
        _
    $region76: #{scse_block_forward.1} parent=5 // pred_fallthru
      _
    %p2110 = scmp.le.s32.totalorder 2, %s22
    // Predicated region
    $region81: #{scse_block_forward.1} parent=5 // pred_check
      %p2111 = pneg %p2110
    $region82: #{scse_block_forward.1} parent=5 // pred_check_branch
      %2113 = sbr.rel (%p2111) target = $region84
    $region83: #{scse_block_forward.1} parent=5 // pred_region
      %s2114 = ssub.s32 %s22, 2
      // Predicated region
      $region85: #{scse_block_forward.1} parent=83 // pred_check
        %p2115 = pneg %p350
      $region86: #{scse_block_forward.1} parent=83 // pred_check_branch
        %2117 = sbr.rel (%p2115) target = $region88
      $region87: #{scse_block_forward.1} parent=83 // pred_region
        %s2118 = smul.u32 2, %s28
        %p2119 = scmp.lt.s32.totalorder %s2118, 3
        %s2120 = scalar_select %p2119, %s2118, 3
        %s2121 = smul.addr %s2120, 4
        %s2122 = smul.addr %s2121, 8
        %s2123 = scalar_lea.vmem %s14, %s2122
      $region88: #{scse_block_forward.1} parent=83 // pred_fallthru
        _
    $region84: #{scse_block_forward.1} parent=5 // pred_fallthru
      _
  $region6: #{scse_block_forward.1} parent=0 // loop_footer
    %s26 = sadd.s32 1, %s22
  $region7: #{scse_block_forward.1} parent=0 // loop_footer_branch
    %21 = sbr.rel target = $region3
  $region8: #{scse_block_forward.1} parent=0 // loop_exit
    _

</llo_original>
